<compile_context>
chip_gen: v7x
topology: tpu7x:2x2x1
jax: 0.10.0
libtpu: 0.0.40
codegen_flags: <defaults>
</compile_context>

<pallas_src>
import jax
import jax.numpy as jnp
import numpy as np
from jax import lax
from jax.experimental import pallas as pl
from jax.experimental.pallas import tpu as pltpu


def _direction_exp_kernel(lip_ref, exp_ref, x_ref, o_ref, wt_ref, r_ref, invd_ref):
    f32 = jnp.float32
    K = r_ref.shape[0]
    col_ids = lax.broadcasted_iota(jnp.int32, (1, K), 1)            # (1, K)

    # ---- factorization: run once, persists in VMEM scratch across batch tiles ----
    @pl.when(pl.program_id(0) == 0)
    def _factorize():
        row_ids = lax.broadcasted_iota(jnp.int32, (K, 1), 0)        # (K, 1)
        lip = lip_ref[...].astype(f32)                               # (512, K1)
        expw = exp_ref[...].astype(f32)                              # (512, K2)
        W = jnp.concatenate([lip, expw], axis=1) + 1e-8              # (512, K) fused concat+eps
        Wt = jnp.transpose(W)                                        # (K, 512) row-major working set
        wt_ref[...] = Wt

        # Gram matrix on the MXU: G = W^T W (K x K), contraction length 512.
        G = jnp.dot(Wt, W, preferred_element_type=f32)

        # Unrolled Cholesky  G = R^T R,  R upper-triangular, positive diagonal.
        R = jnp.zeros((K, K), f32)
        inv_cols = []                                                # 1/R[j,j] as (1,1) values
        for j in range(K):                                           # K static -> fully unrolled
            # row_j[k] = G[j,k] - sum_{m<j} R[m,j] * R[m,k]  (rows >= j of R still zero)
            row_j = G[j:j + 1, :] - jnp.sum(R * R[:, j:j + 1], axis=0, keepdims=True)
            d = row_j[0:1, j:j + 1]                                  # (1,1) squared diagonal
            inv = lax.rsqrt(d)                                       # EUP
            inv_cols.append(inv)
            new_row = jnp.where(col_ids >= j, row_j * inv, 0.0)      # (1, K) (diag -> sqrt(d))
            R = R + new_row * (row_ids == j).astype(f32)             # write row j
        r_ref[...] = R
        invd_ref[...] = jnp.concatenate(inv_cols, axis=1)            # (1, K)

    # ---- per batch tile: y = x @ R^{-T} (back-substitution), out = y @ Wt ----
    x = x_ref[...].astype(f32)                                       # (TB, K)
    TB = x.shape[0]
    R = r_ref[...]
    invd = invd_ref[...]
    y = jnp.zeros((TB, K), f32)
    for j in range(K - 1, -1, -1):
        # s = sum_{k>j} y[:,k] * R[j,k]   (y cols <= j still zero; R[j, k<j] = 0)
        s = jnp.sum(y * R[j:j + 1, :], axis=1, keepdims=True)        # (TB, 1)
        y_col = (x[:, j:j + 1] - s) * invd[0:1, j:j + 1]             # (TB, 1)
        y = y + y_col * (col_ids == j).astype(f32)                   # write column j

    # out = x @ Q^T = y @ Wt : single (TB,K)@(K,512) MXU matmul, lane-dense output.
    o_ref[...] = jnp.dot(y, wt_ref[...], preferred_element_type=f32).astype(o_ref.dtype)


def direction_exp_forward(x, lipnonlip_weight, exp_weight):
    """x: (B, K) with K = lip_dim + pose_dim + exp_dim.
    lipnonlip_weight: (512, lip+pose) forward() input; exp_weight: (512, exp_dim) parameter.
    Returns (B, 512) == sum(diag_embed(x) @ Q.T, dim=1)."""
    B, K = x.shape
    F, K1 = lipnonlip_weight.shape
    F2, K2 = exp_weight.shape
    assert F == F2 == 512 and K1 + K2 == K

    # Batch tile: single tile for small B; 256-row tiles (8-aligned) for large B,
    # reusing the VMEM-resident factorization across tiles.
    TB = B if B <= 512 else 256
    nb = pl.cdiv(B, TB)

    flops = 2 * F * K * K + 2 * B * K * F                 # Gram + output matmul
    bytes_accessed = 4 * (F * K + B * K + B * F)

    return pl.pallas_call(
        _direction_exp_kernel,
        out_shape=jax.ShapeDtypeStruct((B, F), jnp.float32),
        grid_spec=pltpu.PrefetchScalarGridSpec(
            num_scalar_prefetch=0,
            grid=(nb,),
            in_specs=[
                pl.BlockSpec((F, K1), lambda i: (0, 0)),   # lipnonlip_weight (full block)
                pl.BlockSpec((F, K2), lambda i: (0, 0)),   # exp_weight       (full block)
                pl.BlockSpec((TB, K), lambda i: (i, 0)),   # input, tiled over batch
            ],
            out_specs=pl.BlockSpec((TB, F), lambda i: (i, 0)),
            scratch_shapes=[
                pltpu.VMEM((K, F), jnp.float32),           # Wt  (K, 512)
                pltpu.VMEM((K, K), jnp.float32),           # R
                pltpu.VMEM((1, K), jnp.float32),           # 1 / diag(R)
            ],
        ),
        compiler_params=pltpu.CompilerParams(dimension_semantics=("arbitrary",)),
        cost_estimate=pl.CostEstimate(flops=flops, transcendentals=K,
                                      bytes_accessed=bytes_accessed),
    )(lipnonlip_weight, exp_weight, x)


if __name__ == "__main__":
    # Small, shape-consistent config: Direction_exp(lip_dim=6, pose_dim=6, exp_dim=4)
    lip_dim, pose_dim, exp_dim = 6, 6, 4
    K = lip_dim + pose_dim + exp_dim
    B = 2

    key = jax.random.PRNGKey(0)
    k1, k2, k3 = jax.random.split(key, 3)
    # self.weight = nn.Parameter(torch.randn(512, exp_dim)) -> deterministic synthetic init
    exp_weight = jax.random.normal(k1, (512, exp_dim), dtype=jnp.float32)
    # lipnonlip_weight is a forward() input of shape (512, lip_dim + pose_dim)
    lipnonlip_weight = jax.random.normal(k2, (512, lip_dim + pose_dim), dtype=jnp.float32)
    # input is (B, K)
    x = jax.random.normal(k3, (B, K), dtype=jnp.float32)

    out = direction_exp_forward(x, lipnonlip_weight, exp_weight)
    out = jax.block_until_ready(out)

    # Reference check (sign-align LAPACK Q to the positive-diag-R convention used in-kernel).
    weight = jnp.concatenate([lipnonlip_weight, exp_weight], axis=-1) + 1e-8
    Qr, Rr = jnp.linalg.qr(weight)
    sgn = jnp.sign(jnp.diag(Rr))
    Qr = Qr * sgn[None, :]
    ref = x @ Qr.T
    np.testing.assert_allclose(np.asarray(out), np.asarray(ref), rtol=2e-3, atol=2e-3)

    print("KERNEL_OK")
</pallas_src>

<mosaic_0001>
module attributes {stable_mosaic.version = 11 : i64} {
  func.func @_direction_exp_kernel(%arg0: i32, %arg1: memref<512x12xf32, #tpu.memory_space<vmem>>, %arg2: memref<512x4xf32, #tpu.memory_space<vmem>>, %arg3: memref<2x16xf32, #tpu.memory_space<vmem>>, %arg4: memref<2x512xf32, #tpu.memory_space<vmem>>, %arg5: memref<16x512xf32, #tpu.memory_space<vmem>>, %arg6: memref<16x16xf32, #tpu.memory_space<vmem>>, %arg7: memref<1x16xf32, #tpu.memory_space<vmem>>) attributes {dimension_semantics = [#tpu.dimension_semantics<arbitrary>], iteration_bounds = array<i64: 1>, scalar_prefetch = 0 : i64, scratch_operands = 3 : i64, tpu.core_type = #tpu.core_type<tc>, window_params = [{pipeline_mode = #tpu.pipeline_mode<synchronous>, transform_indices = @transform_0, window_bounds = array<i64: 512, 12>}, {pipeline_mode = #tpu.pipeline_mode<synchronous>, transform_indices = @transform_1, window_bounds = array<i64: 512, 4>}, {transform_indices = @transform_2, window_bounds = array<i64: 2, 16>}, {transform_indices = @transform_3, window_bounds = array<i64: 2, 512>}]} {
    %0 = tpu.iota {dimensions = array<i32: 1>} : vector<1x16xi32>
    %c0_i32 = arith.constant 0 : i32
    %1 = arith.cmpi eq, %arg0, %c0_i32 : i32
    %2 = arith.extui %1 : i1 to i32
    %c0_i32_0 = arith.constant 0 : i32
    %3 = arith.cmpi ne, %2, %c0_i32_0 : i32
    scf.if %3 {
      %299 = tpu.iota {dimensions = array<i32: 0>} : vector<16x1xi32>
      %c0_28 = arith.constant 0 : index
      %c0_29 = arith.constant 0 : index
      %300 = vector.load %arg1[%c0_28, %c0_29] : memref<512x12xf32, #tpu.memory_space<vmem>>, vector<512x12xf32>
      %c0_30 = arith.constant 0 : index
      %c0_31 = arith.constant 0 : index
      %301 = vector.load %arg2[%c0_30, %c0_31] : memref<512x4xf32, #tpu.memory_space<vmem>>, vector<512x4xf32>
      %302 = tpu.concatenate %300, %301 in 1 : vector<512x12xf32>, vector<512x4xf32> -> vector<512x16xf32>
      %cst_32 = arith.constant 9.99999993E-9 : f32
      %303 = vector.broadcast %cst_32 : f32 to vector<512x16xf32>
      %304 = arith.addf %302, %303 : vector<512x16xf32>
      %305 = tpu.transpose %304, [1, 0] : vector<512x16xf32> -> vector<16x512xf32>
      %c0_33 = arith.constant 0 : index
      %c0_34 = arith.constant 0 : index
      %306 = vector.load %arg5[%c0_33, %c0_34] : memref<16x512xf32, #tpu.memory_space<vmem>>, vector<16x512xf32>
      tpu.vector_store %arg5[%c0_33, %c0_34], %305 {strides = array<i32>} : memref<16x512xf32, #tpu.memory_space<vmem>>, vector<16x512xf32>,
      %cst_35 = arith.constant dense<0.000000e+00> : vector<16x16xf32>
      %307 = tpu.matmul %305, %304, %cst_35 {dimension_numbers = #tpu.dot_dimension_numbers<[1], [0], [0], [1], [0, 0, 1, 1], [], []>} : vector<16x512xf32>, vector<512x16xf32>, vector<16x16xf32> -> vector<16x16xf32>
      %cst_36 = arith.constant 0.000000e+00 : f32
      %308 = vector.broadcast %cst_36 : f32 to vector<16x16xf32>
      %309 = vector.extract_strided_slice %307 {offsets = [0, 0], sizes = [1, 16], strides = [1, 1]} : vector<16x16xf32> to vector<1x16xf32>
      %310 = vector.extract_strided_slice %308 {offsets = [0, 0], sizes = [16, 1], strides = [1, 1]} : vector<16x16xf32> to vector<16x1xf32>
      %311 = vector.broadcast %310 : vector<16x1xf32> to vector<16x16xf32>
      %312 = arith.mulf %308, %311 : vector<16x16xf32>
      %cst_37 = arith.constant dense<0.000000e+00> : vector<16xf32>
      %313 = vector.multi_reduction <add>, %312, %cst_37 [0] : vector<16x16xf32> to vector<16xf32>
      %314 = vector.shape_cast %313 : vector<16xf32> to vector<1x16xf32>
      %315 = arith.subf %309, %314 : vector<1x16xf32>
      %316 = vector.extract_strided_slice %315 {offsets = [0, 0], sizes = [1, 1], strides = [1, 1]} : vector<1x16xf32> to vector<1x1xf32>
      %317 = math.rsqrt %316 : vector<1x1xf32>
      %c0_i32_38 = arith.constant 0 : i32
      %318 = vector.broadcast %c0_i32_38 : i32 to vector<1x16xi32>
      %319 = arith.cmpi sge, %0, %318 : vector<1x16xi32>
      %320 = vector.broadcast %317 : vector<1x1xf32> to vector<1x16xf32>
      %321 = arith.mulf %315, %320 : vector<1x16xf32>
      %cst_39 = arith.constant 0.000000e+00 : f32
      %322 = vector.broadcast %cst_39 : f32 to vector<1x16xf32>
      %323 = arith.select %319, %321, %322 : vector<1x16xi1>, vector<1x16xf32>
      %c0_i32_40 = arith.constant 0 : i32
      %324 = vector.broadcast %c0_i32_40 : i32 to vector<16x1xi32>
      %325 = arith.cmpi eq, %299, %324 : vector<16x1xi32>
      %326 = arith.extui %325 : vector<16x1xi1> to vector<16x1xi32>
      %327 = arith.sitofp %326 : vector<16x1xi32> to vector<16x1xf32>
      %328 = vector.broadcast %323 : vector<1x16xf32> to vector<16x16xf32>
      %329 = vector.broadcast %327 : vector<16x1xf32> to vector<16x16xf32>
      %330 = arith.mulf %328, %329 : vector<16x16xf32>
      %331 = arith.addf %308, %330 : vector<16x16xf32>
      %332 = vector.extract_strided_slice %307 {offsets = [1, 0], sizes = [1, 16], strides = [1, 1]} : vector<16x16xf32> to vector<1x16xf32>
      %333 = vector.extract_strided_slice %331 {offsets = [0, 1], sizes = [16, 1], strides = [1, 1]} : vector<16x16xf32> to vector<16x1xf32>
      %334 = vector.broadcast %333 : vector<16x1xf32> to vector<16x16xf32>
      %335 = arith.mulf %331, %334 : vector<16x16xf32>
      %cst_41 = arith.constant dense<0.000000e+00> : vector<16xf32>
      %336 = vector.multi_reduction <add>, %335, %cst_41 [0] : vector<16x16xf32> to vector<16xf32>
      %337 = vector.shape_cast %336 : vector<16xf32> to vector<1x16xf32>
      %338 = arith.subf %332, %337 : vector<1x16xf32>
      %339 = vector.extract_strided_slice %338 {offsets = [0, 1], sizes = [1, 1], strides = [1, 1]} : vector<1x16xf32> to vector<1x1xf32>
      %340 = math.rsqrt %339 : vector<1x1xf32>
      %c1_i32_42 = arith.constant 1 : i32
      %341 = vector.broadcast %c1_i32_42 : i32 to vector<1x16xi32>
      %342 = arith.cmpi sge, %0, %341 : vector<1x16xi32>
      %343 = vector.broadcast %340 : vector<1x1xf32> to vector<1x16xf32>
      %344 = arith.mulf %338, %343 : vector<1x16xf32>
      %cst_43 = arith.constant 0.000000e+00 : f32
      %345 = vector.broadcast %cst_43 : f32 to vector<1x16xf32>
      %346 = arith.select %342, %344, %345 : vector<1x16xi1>, vector<1x16xf32>
      %c1_i32_44 = arith.constant 1 : i32
      %347 = vector.broadcast %c1_i32_44 : i32 to vector<16x1xi32>
      %348 = arith.cmpi eq, %299, %347 : vector<16x1xi32>
      %349 = arith.extui %348 : vector<16x1xi1> to vector<16x1xi32>
      %350 = arith.sitofp %349 : vector<16x1xi32> to vector<16x1xf32>
      %351 = vector.broadcast %346 : vector<1x16xf32> to vector<16x16xf32>
      %352 = vector.broadcast %350 : vector<16x1xf32> to vector<16x16xf32>
      %353 = arith.mulf %351, %352 : vector<16x16xf32>
      %354 = arith.addf %331, %353 : vector<16x16xf32>
      %355 = vector.extract_strided_slice %307 {offsets = [2, 0], sizes = [1, 16], strides = [1, 1]} : vector<16x16xf32> to vector<1x16xf32>
      %356 = vector.extract_strided_slice %354 {offsets = [0, 2], sizes = [16, 1], strides = [1, 1]} : vector<16x16xf32> to vector<16x1xf32>
      %357 = vector.broadcast %356 : vector<16x1xf32> to vector<16x16xf32>
      %358 = arith.mulf %354, %357 : vector<16x16xf32>
      %cst_45 = arith.constant dense<0.000000e+00> : vector<16xf32>
      %359 = vector.multi_reduction <add>, %358, %cst_45 [0] : vector<16x16xf32> to vector<16xf32>
      %360 = vector.shape_cast %359 : vector<16xf32> to vector<1x16xf32>
      %361 = arith.subf %355, %360 : vector<1x16xf32>
      %362 = vector.extract_strided_slice %361 {offsets = [0, 2], sizes = [1, 1], strides = [1, 1]} : vector<1x16xf32> to vector<1x1xf32>
      %363 = math.rsqrt %362 : vector<1x1xf32>
      %c2_i32_46 = arith.constant 2 : i32
      %364 = vector.broadcast %c2_i32_46 : i32 to vector<1x16xi32>
      %365 = arith.cmpi sge, %0, %364 : vector<1x16xi32>
      %366 = vector.broadcast %363 : vector<1x1xf32> to vector<1x16xf32>
      %367 = arith.mulf %361, %366 : vector<1x16xf32>
      %cst_47 = arith.constant 0.000000e+00 : f32
      %368 = vector.broadcast %cst_47 : f32 to vector<1x16xf32>
      %369 = arith.select %365, %367, %368 : vector<1x16xi1>, vector<1x16xf32>
      %c2_i32_48 = arith.constant 2 : i32
      %370 = vector.broadcast %c2_i32_48 : i32 to vector<16x1xi32>
      %371 = arith.cmpi eq, %299, %370 : vector<16x1xi32>
      %372 = arith.extui %371 : vector<16x1xi1> to vector<16x1xi32>
      %373 = arith.sitofp %372 : vector<16x1xi32> to vector<16x1xf32>
      %374 = vector.broadcast %369 : vector<1x16xf32> to vector<16x16xf32>
      %375 = vector.broadcast %373 : vector<16x1xf32> to vector<16x16xf32>
      %376 = arith.mulf %374, %375 : vector<16x16xf32>
      %377 = arith.addf %354, %376 : vector<16x16xf32>
      %378 = vector.extract_strided_slice %307 {offsets = [3, 0], sizes = [1, 16], strides = [1, 1]} : vector<16x16xf32> to vector<1x16xf32>
      %379 = vector.extract_strided_slice %377 {offsets = [0, 3], sizes = [16, 1], strides = [1, 1]} : vector<16x16xf32> to vector<16x1xf32>
      %380 = vector.broadcast %379 : vector<16x1xf32> to vector<16x16xf32>
      %381 = arith.mulf %377, %380 : vector<16x16xf32>
      %cst_49 = arith.constant dense<0.000000e+00> : vector<16xf32>
      %382 = vector.multi_reduction <add>, %381, %cst_49 [0] : vector<16x16xf32> to vector<16xf32>
      %383 = vector.shape_cast %382 : vector<16xf32> to vector<1x16xf32>
      %384 = arith.subf %378, %383 : vector<1x16xf32>
      %385 = vector.extract_strided_slice %384 {offsets = [0, 3], sizes = [1, 1], strides = [1, 1]} : vector<1x16xf32> to vector<1x1xf32>
      %386 = math.rsqrt %385 : vector<1x1xf32>
      %c3_i32_50 = arith.constant 3 : i32
      %387 = vector.broadcast %c3_i32_50 : i32 to vector<1x16xi32>
      %388 = arith.cmpi sge, %0, %387 : vector<1x16xi32>
      %389 = vector.broadcast %386 : vector<1x1xf32> to vector<1x16xf32>
      %390 = arith.mulf %384, %389 : vector<1x16xf32>
      %cst_51 = arith.constant 0.000000e+00 : f32
      %391 = vector.broadcast %cst_51 : f32 to vector<1x16xf32>
      %392 = arith.select %388, %390, %391 : vector<1x16xi1>, vector<1x16xf32>
      %c3_i32_52 = arith.constant 3 : i32
      %393 = vector.broadcast %c3_i32_52 : i32 to vector<16x1xi32>
      %394 = arith.cmpi eq, %299, %393 : vector<16x1xi32>
      %395 = arith.extui %394 : vector<16x1xi1> to vector<16x1xi32>
      %396 = arith.sitofp %395 : vector<16x1xi32> to vector<16x1xf32>
      %397 = vector.broadcast %392 : vector<1x16xf32> to vector<16x16xf32>
      %398 = vector.broadcast %396 : vector<16x1xf32> to vector<16x16xf32>
      %399 = arith.mulf %397, %398 : vector<16x16xf32>
      %400 = arith.addf %377, %399 : vector<16x16xf32>
      %401 = vector.extract_strided_slice %307 {offsets = [4, 0], sizes = [1, 16], strides = [1, 1]} : vector<16x16xf32> to vector<1x16xf32>
      %402 = vector.extract_strided_slice %400 {offsets = [0, 4], sizes = [16, 1], strides = [1, 1]} : vector<16x16xf32> to vector<16x1xf32>
      %403 = vector.broadcast %402 : vector<16x1xf32> to vector<16x16xf32>
      %404 = arith.mulf %400, %403 : vector<16x16xf32>
      %cst_53 = arith.constant dense<0.000000e+00> : vector<16xf32>
      %405 = vector.multi_reduction <add>, %404, %cst_53 [0] : vector<16x16xf32> to vector<16xf32>
      %406 = vector.shape_cast %405 : vector<16xf32> to vector<1x16xf32>
      %407 = arith.subf %401, %406 : vector<1x16xf32>
      %408 = vector.extract_strided_slice %407 {offsets = [0, 4], sizes = [1, 1], strides = [1, 1]} : vector<1x16xf32> to vector<1x1xf32>
      %409 = math.rsqrt %408 : vector<1x1xf32>
      %c4_i32_54 = arith.constant 4 : i32
      %410 = vector.broadcast %c4_i32_54 : i32 to vector<1x16xi32>
      %411 = arith.cmpi sge, %0, %410 : vector<1x16xi32>
      %412 = vector.broadcast %409 : vector<1x1xf32> to vector<1x16xf32>
      %413 = arith.mulf %407, %412 : vector<1x16xf32>
      %cst_55 = arith.constant 0.000000e+00 : f32
      %414 = vector.broadcast %cst_55 : f32 to vector<1x16xf32>
      %415 = arith.select %411, %413, %414 : vector<1x16xi1>, vector<1x16xf32>
      %c4_i32_56 = arith.constant 4 : i32
      %416 = vector.broadcast %c4_i32_56 : i32 to vector<16x1xi32>
      %417 = arith.cmpi eq, %299, %416 : vector<16x1xi32>
      %418 = arith.extui %417 : vector<16x1xi1> to vector<16x1xi32>
      %419 = arith.sitofp %418 : vector<16x1xi32> to vector<16x1xf32>
      %420 = vector.broadcast %415 : vector<1x16xf32> to vector<16x16xf32>
      %421 = vector.broadcast %419 : vector<16x1xf32> to vector<16x16xf32>
      %422 = arith.mulf %420, %421 : vector<16x16xf32>
      %423 = arith.addf %400, %422 : vector<16x16xf32>
      %424 = vector.extract_strided_slice %307 {offsets = [5, 0], sizes = [1, 16], strides = [1, 1]} : vector<16x16xf32> to vector<1x16xf32>
      %425 = vector.extract_strided_slice %423 {offsets = [0, 5], sizes = [16, 1], strides = [1, 1]} : vector<16x16xf32> to vector<16x1xf32>
      %426 = vector.broadcast %425 : vector<16x1xf32> to vector<16x16xf32>
      %427 = arith.mulf %423, %426 : vector<16x16xf32>
      %cst_57 = arith.constant dense<0.000000e+00> : vector<16xf32>
      %428 = vector.multi_reduction <add>, %427, %cst_57 [0] : vector<16x16xf32> to vector<16xf32>
      %429 = vector.shape_cast %428 : vector<16xf32> to vector<1x16xf32>
      %430 = arith.subf %424, %429 : vector<1x16xf32>
      %431 = vector.extract_strided_slice %430 {offsets = [0, 5], sizes = [1, 1], strides = [1, 1]} : vector<1x16xf32> to vector<1x1xf32>
      %432 = math.rsqrt %431 : vector<1x1xf32>
      %c5_i32_58 = arith.constant 5 : i32
      %433 = vector.broadcast %c5_i32_58 : i32 to vector<1x16xi32>
      %434 = arith.cmpi sge, %0, %433 : vector<1x16xi32>
      %435 = vector.broadcast %432 : vector<1x1xf32> to vector<1x16xf32>
      %436 = arith.mulf %430, %435 : vector<1x16xf32>
      %cst_59 = arith.constant 0.000000e+00 : f32
      %437 = vector.broadcast %cst_59 : f32 to vector<1x16xf32>
      %438 = arith.select %434, %436, %437 : vector<1x16xi1>, vector<1x16xf32>
      %c5_i32_60 = arith.constant 5 : i32
      %439 = vector.broadcast %c5_i32_60 : i32 to vector<16x1xi32>
      %440 = arith.cmpi eq, %299, %439 : vector<16x1xi32>
      %441 = arith.extui %440 : vector<16x1xi1> to vector<16x1xi32>
      %442 = arith.sitofp %441 : vector<16x1xi32> to vector<16x1xf32>
      %443 = vector.broadcast %438 : vector<1x16xf32> to vector<16x16xf32>
      %444 = vector.broadcast %442 : vector<16x1xf32> to vector<16x16xf32>
      %445 = arith.mulf %443, %444 : vector<16x16xf32>
      %446 = arith.addf %423, %445 : vector<16x16xf32>
      %447 = vector.extract_strided_slice %307 {offsets = [6, 0], sizes = [1, 16], strides = [1, 1]} : vector<16x16xf32> to vector<1x16xf32>
      %448 = vector.extract_strided_slice %446 {offsets = [0, 6], sizes = [16, 1], strides = [1, 1]} : vector<16x16xf32> to vector<16x1xf32>
      %449 = vector.broadcast %448 : vector<16x1xf32> to vector<16x16xf32>
      %450 = arith.mulf %446, %449 : vector<16x16xf32>
      %cst_61 = arith.constant dense<0.000000e+00> : vector<16xf32>
      %451 = vector.multi_reduction <add>, %450, %cst_61 [0] : vector<16x16xf32> to vector<16xf32>
      %452 = vector.shape_cast %451 : vector<16xf32> to vector<1x16xf32>
      %453 = arith.subf %447, %452 : vector<1x16xf32>
      %454 = vector.extract_strided_slice %453 {offsets = [0, 6], sizes = [1, 1], strides = [1, 1]} : vector<1x16xf32> to vector<1x1xf32>
      %455 = math.rsqrt %454 : vector<1x1xf32>
      %c6_i32_62 = arith.constant 6 : i32
      %456 = vector.broadcast %c6_i32_62 : i32 to vector<1x16xi32>
      %457 = arith.cmpi sge, %0, %456 : vector<1x16xi32>
      %458 = vector.broadcast %455 : vector<1x1xf32> to vector<1x16xf32>
      %459 = arith.mulf %453, %458 : vector<1x16xf32>
      %cst_63 = arith.constant 0.000000e+00 : f32
      %460 = vector.broadcast %cst_63 : f32 to vector<1x16xf32>
      %461 = arith.select %457, %459, %460 : vector<1x16xi1>, vector<1x16xf32>
      %c6_i32_64 = arith.constant 6 : i32
      %462 = vector.broadcast %c6_i32_64 : i32 to vector<16x1xi32>
      %463 = arith.cmpi eq, %299, %462 : vector<16x1xi32>
      %464 = arith.extui %463 : vector<16x1xi1> to vector<16x1xi32>
      %465 = arith.sitofp %464 : vector<16x1xi32> to vector<16x1xf32>
      %466 = vector.broadcast %461 : vector<1x16xf32> to vector<16x16xf32>
      %467 = vector.broadcast %465 : vector<16x1xf32> to vector<16x16xf32>
      %468 = arith.mulf %466, %467 : vector<16x16xf32>
      %469 = arith.addf %446, %468 : vector<16x16xf32>
      %470 = vector.extract_strided_slice %307 {offsets = [7, 0], sizes = [1, 16], strides = [1, 1]} : vector<16x16xf32> to vector<1x16xf32>
      %471 = vector.extract_strided_slice %469 {offsets = [0, 7], sizes = [16, 1], strides = [1, 1]} : vector<16x16xf32> to vector<16x1xf32>
      %472 = vector.broadcast %471 : vector<16x1xf32> to vector<16x16xf32>
      %473 = arith.mulf %469, %472 : vector<16x16xf32>
      %cst_65 = arith.constant dense<0.000000e+00> : vector<16xf32>
      %474 = vector.multi_reduction <add>, %473, %cst_65 [0] : vector<16x16xf32> to vector<16xf32>
      %475 = vector.shape_cast %474 : vector<16xf32> to vector<1x16xf32>
      %476 = arith.subf %470, %475 : vector<1x16xf32>
      %477 = vector.extract_strided_slice %476 {offsets = [0, 7], sizes = [1, 1], strides = [1, 1]} : vector<1x16xf32> to vector<1x1xf32>
      %478 = math.rsqrt %477 : vector<1x1xf32>
      %c7_i32_66 = arith.constant 7 : i32
      %479 = vector.broadcast %c7_i32_66 : i32 to vector<1x16xi32>
      %480 = arith.cmpi sge, %0, %479 : vector<1x16xi32>
      %481 = vector.broadcast %478 : vector<1x1xf32> to vector<1x16xf32>
      %482 = arith.mulf %476, %481 : vector<1x16xf32>
      %cst_67 = arith.constant 0.000000e+00 : f32
      %483 = vector.broadcast %cst_67 : f32 to vector<1x16xf32>
      %484 = arith.select %480, %482, %483 : vector<1x16xi1>, vector<1x16xf32>
      %c7_i32_68 = arith.constant 7 : i32
      %485 = vector.broadcast %c7_i32_68 : i32 to vector<16x1xi32>
      %486 = arith.cmpi eq, %299, %485 : vector<16x1xi32>
      %487 = arith.extui %486 : vector<16x1xi1> to vector<16x1xi32>
      %488 = arith.sitofp %487 : vector<16x1xi32> to vector<16x1xf32>
      %489 = vector.broadcast %484 : vector<1x16xf32> to vector<16x16xf32>
      %490 = vector.broadcast %488 : vector<16x1xf32> to vector<16x16xf32>
      %491 = arith.mulf %489, %490 : vector<16x16xf32>
      %492 = arith.addf %469, %491 : vector<16x16xf32>
      %493 = vector.extract_strided_slice %307 {offsets = [8, 0], sizes = [1, 16], strides = [1, 1]} : vector<16x16xf32> to vector<1x16xf32>
      %494 = vector.extract_strided_slice %492 {offsets = [0, 8], sizes = [16, 1], strides = [1, 1]} : vector<16x16xf32> to vector<16x1xf32>
      %495 = vector.broadcast %494 : vector<16x1xf32> to vector<16x16xf32>
      %496 = arith.mulf %492, %495 : vector<16x16xf32>
      %cst_69 = arith.constant dense<0.000000e+00> : vector<16xf32>
      %497 = vector.multi_reduction <add>, %496, %cst_69 [0] : vector<16x16xf32> to vector<16xf32>
      %498 = vector.shape_cast %497 : vector<16xf32> to vector<1x16xf32>
      %499 = arith.subf %493, %498 : vector<1x16xf32>
      %500 = vector.extract_strided_slice %499 {offsets = [0, 8], sizes = [1, 1], strides = [1, 1]} : vector<1x16xf32> to vector<1x1xf32>
      %501 = math.rsqrt %500 : vector<1x1xf32>
      %c8_i32_70 = arith.constant 8 : i32
      %502 = vector.broadcast %c8_i32_70 : i32 to vector<1x16xi32>
      %503 = arith.cmpi sge, %0, %502 : vector<1x16xi32>
      %504 = vector.broadcast %501 : vector<1x1xf32> to vector<1x16xf32>
      %505 = arith.mulf %499, %504 : vector<1x16xf32>
      %cst_71 = arith.constant 0.000000e+00 : f32
      %506 = vector.broadcast %cst_71 : f32 to vector<1x16xf32>
      %507 = arith.select %503, %505, %506 : vector<1x16xi1>, vector<1x16xf32>
      %c8_i32_72 = arith.constant 8 : i32
      %508 = vector.broadcast %c8_i32_72 : i32 to vector<16x1xi32>
      %509 = arith.cmpi eq, %299, %508 : vector<16x1xi32>
      %510 = arith.extui %509 : vector<16x1xi1> to vector<16x1xi32>
      %511 = arith.sitofp %510 : vector<16x1xi32> to vector<16x1xf32>
      %512 = vector.broadcast %507 : vector<1x16xf32> to vector<16x16xf32>
      %513 = vector.broadcast %511 : vector<16x1xf32> to vector<16x16xf32>
      %514 = arith.mulf %512, %513 : vector<16x16xf32>
      %515 = arith.addf %492, %514 : vector<16x16xf32>
      %516 = vector.extract_strided_slice %307 {offsets = [9, 0], sizes = [1, 16], strides = [1, 1]} : vector<16x16xf32> to vector<1x16xf32>
      %517 = vector.extract_strided_slice %515 {offsets = [0, 9], sizes = [16, 1], strides = [1, 1]} : vector<16x16xf32> to vector<16x1xf32>
      %518 = vector.broadcast %517 : vector<16x1xf32> to vector<16x16xf32>
      %519 = arith.mulf %515, %518 : vector<16x16xf32>
      %cst_73 = arith.constant dense<0.000000e+00> : vector<16xf32>
      %520 = vector.multi_reduction <add>, %519, %cst_73 [0] : vector<16x16xf32> to vector<16xf32>
      %521 = vector.shape_cast %520 : vector<16xf32> to vector<1x16xf32>
      %522 = arith.subf %516, %521 : vector<1x16xf32>
      %523 = vector.extract_strided_slice %522 {offsets = [0, 9], sizes = [1, 1], strides = [1, 1]} : vector<1x16xf32> to vector<1x1xf32>
      %524 = math.rsqrt %523 : vector<1x1xf32>
      %c9_i32_74 = arith.constant 9 : i32
      %525 = vector.broadcast %c9_i32_74 : i32 to vector<1x16xi32>
      %526 = arith.cmpi sge, %0, %525 : vector<1x16xi32>
      %527 = vector.broadcast %524 : vector<1x1xf32> to vector<1x16xf32>
      %528 = arith.mulf %522, %527 : vector<1x16xf32>
      %cst_75 = arith.constant 0.000000e+00 : f32
      %529 = vector.broadcast %cst_75 : f32 to vector<1x16xf32>
      %530 = arith.select %526, %528, %529 : vector<1x16xi1>, vector<1x16xf32>
      %c9_i32_76 = arith.constant 9 : i32
      %531 = vector.broadcast %c9_i32_76 : i32 to vector<16x1xi32>
      %532 = arith.cmpi eq, %299, %531 : vector<16x1xi32>
      %533 = arith.extui %532 : vector<16x1xi1> to vector<16x1xi32>
      %534 = arith.sitofp %533 : vector<16x1xi32> to vector<16x1xf32>
      %535 = vector.broadcast %530 : vector<1x16xf32> to vector<16x16xf32>
      %536 = vector.broadcast %534 : vector<16x1xf32> to vector<16x16xf32>
      %537 = arith.mulf %535, %536 : vector<16x16xf32>
      %538 = arith.addf %515, %537 : vector<16x16xf32>
      %539 = vector.extract_strided_slice %307 {offsets = [10, 0], sizes = [1, 16], strides = [1, 1]} : vector<16x16xf32> to vector<1x16xf32>
      %540 = vector.extract_strided_slice %538 {offsets = [0, 10], sizes = [16, 1], strides = [1, 1]} : vector<16x16xf32> to vector<16x1xf32>
      %541 = vector.broadcast %540 : vector<16x1xf32> to vector<16x16xf32>
      %542 = arith.mulf %538, %541 : vector<16x16xf32>
      %cst_77 = arith.constant dense<0.000000e+00> : vector<16xf32>
      %543 = vector.multi_reduction <add>, %542, %cst_77 [0] : vector<16x16xf32> to vector<16xf32>
      %544 = vector.shape_cast %543 : vector<16xf32> to vector<1x16xf32>
      %545 = arith.subf %539, %544 : vector<1x16xf32>
      %546 = vector.extract_strided_slice %545 {offsets = [0, 10], sizes = [1, 1], strides = [1, 1]} : vector<1x16xf32> to vector<1x1xf32>
      %547 = math.rsqrt %546 : vector<1x1xf32>
      %c10_i32_78 = arith.constant 10 : i32
      %548 = vector.broadcast %c10_i32_78 : i32 to vector<1x16xi32>
      %549 = arith.cmpi sge, %0, %548 : vector<1x16xi32>
      %550 = vector.broadcast %547 : vector<1x1xf32> to vector<1x16xf32>
      %551 = arith.mulf %545, %550 : vector<1x16xf32>
      %cst_79 = arith.constant 0.000000e+00 : f32
      %552 = vector.broadcast %cst_79 : f32 to vector<1x16xf32>
      %553 = arith.select %549, %551, %552 : vector<1x16xi1>, vector<1x16xf32>
      %c10_i32_80 = arith.constant 10 : i32
      %554 = vector.broadcast %c10_i32_80 : i32 to vector<16x1xi32>
      %555 = arith.cmpi eq, %299, %554 : vector<16x1xi32>
      %556 = arith.extui %555 : vector<16x1xi1> to vector<16x1xi32>
      %557 = arith.sitofp %556 : vector<16x1xi32> to vector<16x1xf32>
      %558 = vector.broadcast %553 : vector<1x16xf32> to vector<16x16xf32>
      %559 = vector.broadcast %557 : vector<16x1xf32> to vector<16x16xf32>
      %560 = arith.mulf %558, %559 : vector<16x16xf32>
      %561 = arith.addf %538, %560 : vector<16x16xf32>
      %562 = vector.extract_strided_slice %307 {offsets = [11, 0], sizes = [1, 16], strides = [1, 1]} : vector<16x16xf32> to vector<1x16xf32>
      %563 = vector.extract_strided_slice %561 {offsets = [0, 11], sizes = [16, 1], strides = [1, 1]} : vector<16x16xf32> to vector<16x1xf32>
      %564 = vector.broadcast %563 : vector<16x1xf32> to vector<16x16xf32>
      %565 = arith.mulf %561, %564 : vector<16x16xf32>
      %cst_81 = arith.constant dense<0.000000e+00> : vector<16xf32>
      %566 = vector.multi_reduction <add>, %565, %cst_81 [0] : vector<16x16xf32> to vector<16xf32>
      %567 = vector.shape_cast %566 : vector<16xf32> to vector<1x16xf32>
      %568 = arith.subf %562, %567 : vector<1x16xf32>
      %569 = vector.extract_strided_slice %568 {offsets = [0, 11], sizes = [1, 1], strides = [1, 1]} : vector<1x16xf32> to vector<1x1xf32>
      %570 = math.rsqrt %569 : vector<1x1xf32>
      %c11_i32_82 = arith.constant 11 : i32
      %571 = vector.broadcast %c11_i32_82 : i32 to vector<1x16xi32>
      %572 = arith.cmpi sge, %0, %571 : vector<1x16xi32>
      %573 = vector.broadcast %570 : vector<1x1xf32> to vector<1x16xf32>
      %574 = arith.mulf %568, %573 : vector<1x16xf32>
      %cst_83 = arith.constant 0.000000e+00 : f32
      %575 = vector.broadcast %cst_83 : f32 to vector<1x16xf32>
      %576 = arith.select %572, %574, %575 : vector<1x16xi1>, vector<1x16xf32>
      %c11_i32_84 = arith.constant 11 : i32
      %577 = vector.broadcast %c11_i32_84 : i32 to vector<16x1xi32>
      %578 = arith.cmpi eq, %299, %577 : vector<16x1xi32>
      %579 = arith.extui %578 : vector<16x1xi1> to vector<16x1xi32>
      %580 = arith.sitofp %579 : vector<16x1xi32> to vector<16x1xf32>
      %581 = vector.broadcast %576 : vector<1x16xf32> to vector<16x16xf32>
      %582 = vector.broadcast %580 : vector<16x1xf32> to vector<16x16xf32>
      %583 = arith.mulf %581, %582 : vector<16x16xf32>
      %584 = arith.addf %561, %583 : vector<16x16xf32>
      %585 = vector.extract_strided_slice %307 {offsets = [12, 0], sizes = [1, 16], strides = [1, 1]} : vector<16x16xf32> to vector<1x16xf32>
      %586 = vector.extract_strided_slice %584 {offsets = [0, 12], sizes = [16, 1], strides = [1, 1]} : vector<16x16xf32> to vector<16x1xf32>
      %587 = vector.broadcast %586 : vector<16x1xf32> to vector<16x16xf32>
      %588 = arith.mulf %584, %587 : vector<16x16xf32>
      %cst_85 = arith.constant dense<0.000000e+00> : vector<16xf32>
      %589 = vector.multi_reduction <add>, %588, %cst_85 [0] : vector<16x16xf32> to vector<16xf32>
      %590 = vector.shape_cast %589 : vector<16xf32> to vector<1x16xf32>
      %591 = arith.subf %585, %590 : vector<1x16xf32>
      %592 = vector.extract_strided_slice %591 {offsets = [0, 12], sizes = [1, 1], strides = [1, 1]} : vector<1x16xf32> to vector<1x1xf32>
      %593 = math.rsqrt %592 : vector<1x1xf32>
      %c12_i32_86 = arith.constant 12 : i32
      %594 = vector.broadcast %c12_i32_86 : i32 to vector<1x16xi32>
      %595 = arith.cmpi sge, %0, %594 : vector<1x16xi32>
      %596 = vector.broadcast %593 : vector<1x1xf32> to vector<1x16xf32>
      %597 = arith.mulf %591, %596 : vector<1x16xf32>
      %cst_87 = arith.constant 0.000000e+00 : f32
      %598 = vector.broadcast %cst_87 : f32 to vector<1x16xf32>
      %599 = arith.select %595, %597, %598 : vector<1x16xi1>, vector<1x16xf32>
      %c12_i32_88 = arith.constant 12 : i32
      %600 = vector.broadcast %c12_i32_88 : i32 to vector<16x1xi32>
      %601 = arith.cmpi eq, %299, %600 : vector<16x1xi32>
      %602 = arith.extui %601 : vector<16x1xi1> to vector<16x1xi32>
      %603 = arith.sitofp %602 : vector<16x1xi32> to vector<16x1xf32>
      %604 = vector.broadcast %599 : vector<1x16xf32> to vector<16x16xf32>
      %605 = vector.broadcast %603 : vector<16x1xf32> to vector<16x16xf32>
      %606 = arith.mulf %604, %605 : vector<16x16xf32>
      %607 = arith.addf %584, %606 : vector<16x16xf32>
      %608 = vector.extract_strided_slice %307 {offsets = [13, 0], sizes = [1, 16], strides = [1, 1]} : vector<16x16xf32> to vector<1x16xf32>
      %609 = vector.extract_strided_slice %607 {offsets = [0, 13], sizes = [16, 1], strides = [1, 1]} : vector<16x16xf32> to vector<16x1xf32>
      %610 = vector.broadcast %609 : vector<16x1xf32> to vector<16x16xf32>
      %611 = arith.mulf %607, %610 : vector<16x16xf32>
      %cst_89 = arith.constant dense<0.000000e+00> : vector<16xf32>
      %612 = vector.multi_reduction <add>, %611, %cst_89 [0] : vector<16x16xf32> to vector<16xf32>
      %613 = vector.shape_cast %612 : vector<16xf32> to vector<1x16xf32>
      %614 = arith.subf %608, %613 : vector<1x16xf32>
      %615 = vector.extract_strided_slice %614 {offsets = [0, 13], sizes = [1, 1], strides = [1, 1]} : vector<1x16xf32> to vector<1x1xf32>
      %616 = math.rsqrt %615 : vector<1x1xf32>
      %c13_i32_90 = arith.constant 13 : i32
      %617 = vector.broadcast %c13_i32_90 : i32 to vector<1x16xi32>
      %618 = arith.cmpi sge, %0, %617 : vector<1x16xi32>
      %619 = vector.broadcast %616 : vector<1x1xf32> to vector<1x16xf32>
      %620 = arith.mulf %614, %619 : vector<1x16xf32>
      %cst_91 = arith.constant 0.000000e+00 : f32
      %621 = vector.broadcast %cst_91 : f32 to vector<1x16xf32>
      %622 = arith.select %618, %620, %621 : vector<1x16xi1>, vector<1x16xf32>
      %c13_i32_92 = arith.constant 13 : i32
      %623 = vector.broadcast %c13_i32_92 : i32 to vector<16x1xi32>
      %624 = arith.cmpi eq, %299, %623 : vector<16x1xi32>
      %625 = arith.extui %624 : vector<16x1xi1> to vector<16x1xi32>
      %626 = arith.sitofp %625 : vector<16x1xi32> to vector<16x1xf32>
      %627 = vector.broadcast %622 : vector<1x16xf32> to vector<16x16xf32>
      %628 = vector.broadcast %626 : vector<16x1xf32> to vector<16x16xf32>
      %629 = arith.mulf %627, %628 : vector<16x16xf32>
      %630 = arith.addf %607, %629 : vector<16x16xf32>
      %631 = vector.extract_strided_slice %307 {offsets = [14, 0], sizes = [1, 16], strides = [1, 1]} : vector<16x16xf32> to vector<1x16xf32>
      %632 = vector.extract_strided_slice %630 {offsets = [0, 14], sizes = [16, 1], strides = [1, 1]} : vector<16x16xf32> to vector<16x1xf32>
      %633 = vector.broadcast %632 : vector<16x1xf32> to vector<16x16xf32>
      %634 = arith.mulf %630, %633 : vector<16x16xf32>
      %cst_93 = arith.constant dense<0.000000e+00> : vector<16xf32>
      %635 = vector.multi_reduction <add>, %634, %cst_93 [0] : vector<16x16xf32> to vector<16xf32>
      %636 = vector.shape_cast %635 : vector<16xf32> to vector<1x16xf32>
      %637 = arith.subf %631, %636 : vector<1x16xf32>
      %638 = vector.extract_strided_slice %637 {offsets = [0, 14], sizes = [1, 1], strides = [1, 1]} : vector<1x16xf32> to vector<1x1xf32>
      %639 = math.rsqrt %638 : vector<1x1xf32>
      %c14_i32_94 = arith.constant 14 : i32
      %640 = vector.broadcast %c14_i32_94 : i32 to vector<1x16xi32>
      %641 = arith.cmpi sge, %0, %640 : vector<1x16xi32>
      %642 = vector.broadcast %639 : vector<1x1xf32> to vector<1x16xf32>
      %643 = arith.mulf %637, %642 : vector<1x16xf32>
      %cst_95 = arith.constant 0.000000e+00 : f32
      %644 = vector.broadcast %cst_95 : f32 to vector<1x16xf32>
      %645 = arith.select %641, %643, %644 : vector<1x16xi1>, vector<1x16xf32>
      %c14_i32_96 = arith.constant 14 : i32
      %646 = vector.broadcast %c14_i32_96 : i32 to vector<16x1xi32>
      %647 = arith.cmpi eq, %299, %646 : vector<16x1xi32>
      %648 = arith.extui %647 : vector<16x1xi1> to vector<16x1xi32>
      %649 = arith.sitofp %648 : vector<16x1xi32> to vector<16x1xf32>
      %650 = vector.broadcast %645 : vector<1x16xf32> to vector<16x16xf32>
      %651 = vector.broadcast %649 : vector<16x1xf32> to vector<16x16xf32>
      %652 = arith.mulf %650, %651 : vector<16x16xf32>
      %653 = arith.addf %630, %652 : vector<16x16xf32>
      %654 = vector.extract_strided_slice %307 {offsets = [15, 0], sizes = [1, 16], strides = [1, 1]} : vector<16x16xf32> to vector<1x16xf32>
      %655 = vector.extract_strided_slice %653 {offsets = [0, 15], sizes = [16, 1], strides = [1, 1]} : vector<16x16xf32> to vector<16x1xf32>
      %656 = vector.broadcast %655 : vector<16x1xf32> to vector<16x16xf32>
      %657 = arith.mulf %653, %656 : vector<16x16xf32>
      %cst_97 = arith.constant dense<0.000000e+00> : vector<16xf32>
      %658 = vector.multi_reduction <add>, %657, %cst_97 [0] : vector<16x16xf32> to vector<16xf32>
      %659 = vector.shape_cast %658 : vector<16xf32> to vector<1x16xf32>
      %660 = arith.subf %654, %659 : vector<1x16xf32>
      %661 = vector.extract_strided_slice %660 {offsets = [0, 15], sizes = [1, 1], strides = [1, 1]} : vector<1x16xf32> to vector<1x1xf32>
      %662 = math.rsqrt %661 : vector<1x1xf32>
      %c15_i32_98 = arith.constant 15 : i32
      %663 = vector.broadcast %c15_i32_98 : i32 to vector<1x16xi32>
      %664 = arith.cmpi sge, %0, %663 : vector<1x16xi32>
      %665 = vector.broadcast %662 : vector<1x1xf32> to vector<1x16xf32>
      %666 = arith.mulf %660, %665 : vector<1x16xf32>
      %cst_99 = arith.constant 0.000000e+00 : f32
      %667 = vector.broadcast %cst_99 : f32 to vector<1x16xf32>
      %668 = arith.select %664, %666, %667 : vector<1x16xi1>, vector<1x16xf32>
      %c15_i32_100 = arith.constant 15 : i32
      %669 = vector.broadcast %c15_i32_100 : i32 to vector<16x1xi32>
      %670 = arith.cmpi eq, %299, %669 : vector<16x1xi32>
      %671 = arith.extui %670 : vector<16x1xi1> to vector<16x1xi32>
      %672 = arith.sitofp %671 : vector<16x1xi32> to vector<16x1xf32>
      %673 = vector.broadcast %668 : vector<1x16xf32> to vector<16x16xf32>
      %674 = vector.broadcast %672 : vector<16x1xf32> to vector<16x16xf32>
      %675 = arith.mulf %673, %674 : vector<16x16xf32>
      %676 = arith.addf %653, %675 : vector<16x16xf32>
      %c0_101 = arith.constant 0 : index
      %c0_102 = arith.constant 0 : index
      %677 = vector.load %arg6[%c0_101, %c0_102] : memref<16x16xf32, #tpu.memory_space<vmem>>, vector<16x16xf32>
      tpu.vector_store %arg6[%c0_101, %c0_102], %676 {strides = array<i32>} : memref<16x16xf32, #tpu.memory_space<vmem>>, vector<16x16xf32>,
      %678 = tpu.concatenate %317, %340, %363, %386, %409, %432, %455, %478, %501, %524, %547, %570, %593, %616, %639, %662 in 1 : vector<1x1xf32>, vector<1x1xf32>, vector<1x1xf32>, vector<1x1xf32>, vector<1x1xf32>, vector<1x1xf32>, vector<1x1xf32>, vector<1x1xf32>, vector<1x1xf32>, vector<1x1xf32>, vector<1x1xf32>, vector<1x1xf32>, vector<1x1xf32>, vector<1x1xf32>, vector<1x1xf32>, vector<1x1xf32> -> vector<1x16xf32>
      %c0_103 = arith.constant 0 : index
      %c0_104 = arith.constant 0 : index
      %679 = vector.load %arg7[%c0_103, %c0_104] : memref<1x16xf32, #tpu.memory_space<vmem>>, vector<1x16xf32>
      tpu.vector_store %arg7[%c0_103, %c0_104], %678 {strides = array<i32>} : memref<1x16xf32, #tpu.memory_space<vmem>>, vector<1x16xf32>,
    } else {
    }
    %c0 = arith.constant 0 : index
    %c0_1 = arith.constant 0 : index
    %4 = vector.load %arg3[%c0, %c0_1] : memref<2x16xf32, #tpu.memory_space<vmem>>, vector<2x16xf32>
    %c0_2 = arith.constant 0 : index
    %c0_3 = arith.constant 0 : index
    %5 = vector.load %arg6[%c0_2, %c0_3] : memref<16x16xf32, #tpu.memory_space<vmem>>, vector<16x16xf32>
    %c0_4 = arith.constant 0 : index
    %c0_5 = arith.constant 0 : index
    %6 = vector.load %arg7[%c0_4, %c0_5] : memref<1x16xf32, #tpu.memory_space<vmem>>, vector<1x16xf32>
    %cst = arith.constant 0.000000e+00 : f32
    %7 = vector.broadcast %cst : f32 to vector<2x16xf32>
    %8 = vector.extract_strided_slice %5 {offsets = [15, 0], sizes = [1, 16], strides = [1, 1]} : vector<16x16xf32> to vector<1x16xf32>
    %9 = vector.broadcast %8 : vector<1x16xf32> to vector<2x16xf32>
    %10 = arith.mulf %7, %9 : vector<2x16xf32>
    %cst_6 = arith.constant dense<0.000000e+00> : vector<2xf32>
    %11 = vector.multi_reduction <add>, %10, %cst_6 [1] : vector<2x16xf32> to vector<2xf32>
    %12 = vector.shape_cast %11 : vector<2xf32> to vector<2x1xf32>
    %13 = vector.extract_strided_slice %4 {offsets = [0, 15], sizes = [2, 1], strides = [1, 1]} : vector<2x16xf32> to vector<2x1xf32>
    %14 = arith.subf %13, %12 : vector<2x1xf32>
    %15 = vector.extract_strided_slice %6 {offsets = [0, 15], sizes = [1, 1], strides = [1, 1]} : vector<1x16xf32> to vector<1x1xf32>
    %16 = vector.broadcast %15 : vector<1x1xf32> to vector<2x1xf32>
    %17 = arith.mulf %14, %16 : vector<2x1xf32>
    %c15_i32 = arith.constant 15 : i32
    %18 = vector.broadcast %c15_i32 : i32 to vector<1x16xi32>
    %19 = arith.cmpi eq, %0, %18 : vector<1x16xi32>
    %20 = arith.extui %19 : vector<1x16xi1> to vector<1x16xi32>
    %21 = arith.sitofp %20 : vector<1x16xi32> to vector<1x16xf32>
    %22 = vector.broadcast %17 : vector<2x1xf32> to vector<2x16xf32>
    %23 = vector.broadcast %21 : vector<1x16xf32> to vector<2x16xf32>
    %24 = arith.mulf %22, %23 : vector<2x16xf32>
    %25 = arith.addf %7, %24 : vector<2x16xf32>
    %26 = vector.extract_strided_slice %5 {offsets = [14, 0], sizes = [1, 16], strides = [1, 1]} : vector<16x16xf32> to vector<1x16xf32>
    %27 = vector.broadcast %26 : vector<1x16xf32> to vector<2x16xf32>
    %28 = arith.mulf %25, %27 : vector<2x16xf32>
    %cst_7 = arith.constant dense<0.000000e+00> : vector<2xf32>
    %29 = vector.multi_reduction <add>, %28, %cst_7 [1] : vector<2x16xf32> to vector<2xf32>
    %30 = vector.shape_cast %29 : vector<2xf32> to vector<2x1xf32>
    %31 = vector.extract_strided_slice %4 {offsets = [0, 14], sizes = [2, 1], strides = [1, 1]} : vector<2x16xf32> to vector<2x1xf32>
    %32 = arith.subf %31, %30 : vector<2x1xf32>
    %33 = vector.extract_strided_slice %6 {offsets = [0, 14], sizes = [1, 1], strides = [1, 1]} : vector<1x16xf32> to vector<1x1xf32>
    %34 = vector.broadcast %33 : vector<1x1xf32> to vector<2x1xf32>
    %35 = arith.mulf %32, %34 : vector<2x1xf32>
    %c14_i32 = arith.constant 14 : i32
    %36 = vector.broadcast %c14_i32 : i32 to vector<1x16xi32>
    %37 = arith.cmpi eq, %0, %36 : vector<1x16xi32>
    %38 = arith.extui %37 : vector<1x16xi1> to vector<1x16xi32>
    %39 = arith.sitofp %38 : vector<1x16xi32> to vector<1x16xf32>
    %40 = vector.broadcast %35 : vector<2x1xf32> to vector<2x16xf32>
    %41 = vector.broadcast %39 : vector<1x16xf32> to vector<2x16xf32>
    %42 = arith.mulf %40, %41 : vector<2x16xf32>
    %43 = arith.addf %25, %42 : vector<2x16xf32>
    %44 = vector.extract_strided_slice %5 {offsets = [13, 0], sizes = [1, 16], strides = [1, 1]} : vector<16x16xf32> to vector<1x16xf32>
    %45 = vector.broadcast %44 : vector<1x16xf32> to vector<2x16xf32>
    %46 = arith.mulf %43, %45 : vector<2x16xf32>
    %cst_8 = arith.constant dense<0.000000e+00> : vector<2xf32>
    %47 = vector.multi_reduction <add>, %46, %cst_8 [1] : vector<2x16xf32> to vector<2xf32>
    %48 = vector.shape_cast %47 : vector<2xf32> to vector<2x1xf32>
    %49 = vector.extract_strided_slice %4 {offsets = [0, 13], sizes = [2, 1], strides = [1, 1]} : vector<2x16xf32> to vector<2x1xf32>
    %50 = arith.subf %49, %48 : vector<2x1xf32>
    %51 = vector.extract_strided_slice %6 {offsets = [0, 13], sizes = [1, 1], strides = [1, 1]} : vector<1x16xf32> to vector<1x1xf32>
    %52 = vector.broadcast %51 : vector<1x1xf32> to vector<2x1xf32>
    %53 = arith.mulf %50, %52 : vector<2x1xf32>
    %c13_i32 = arith.constant 13 : i32
    %54 = vector.broadcast %c13_i32 : i32 to vector<1x16xi32>
    %55 = arith.cmpi eq, %0, %54 : vector<1x16xi32>
    %56 = arith.extui %55 : vector<1x16xi1> to vector<1x16xi32>
    %57 = arith.sitofp %56 : vector<1x16xi32> to vector<1x16xf32>
    %58 = vector.broadcast %53 : vector<2x1xf32> to vector<2x16xf32>
    %59 = vector.broadcast %57 : vector<1x16xf32> to vector<2x16xf32>
    %60 = arith.mulf %58, %59 : vector<2x16xf32>
    %61 = arith.addf %43, %60 : vector<2x16xf32>
    %62 = vector.extract_strided_slice %5 {offsets = [12, 0], sizes = [1, 16], strides = [1, 1]} : vector<16x16xf32> to vector<1x16xf32>
    %63 = vector.broadcast %62 : vector<1x16xf32> to vector<2x16xf32>
    %64 = arith.mulf %61, %63 : vector<2x16xf32>
    %cst_9 = arith.constant dense<0.000000e+00> : vector<2xf32>
    %65 = vector.multi_reduction <add>, %64, %cst_9 [1] : vector<2x16xf32> to vector<2xf32>
    %66 = vector.shape_cast %65 : vector<2xf32> to vector<2x1xf32>
    %67 = vector.extract_strided_slice %4 {offsets = [0, 12], sizes = [2, 1], strides = [1, 1]} : vector<2x16xf32> to vector<2x1xf32>
    %68 = arith.subf %67, %66 : vector<2x1xf32>
    %69 = vector.extract_strided_slice %6 {offsets = [0, 12], sizes = [1, 1], strides = [1, 1]} : vector<1x16xf32> to vector<1x1xf32>
    %70 = vector.broadcast %69 : vector<1x1xf32> to vector<2x1xf32>
    %71 = arith.mulf %68, %70 : vector<2x1xf32>
    %c12_i32 = arith.constant 12 : i32
    %72 = vector.broadcast %c12_i32 : i32 to vector<1x16xi32>
    %73 = arith.cmpi eq, %0, %72 : vector<1x16xi32>
    %74 = arith.extui %73 : vector<1x16xi1> to vector<1x16xi32>
    %75 = arith.sitofp %74 : vector<1x16xi32> to vector<1x16xf32>
    %76 = vector.broadcast %71 : vector<2x1xf32> to vector<2x16xf32>
    %77 = vector.broadcast %75 : vector<1x16xf32> to vector<2x16xf32>
    %78 = arith.mulf %76, %77 : vector<2x16xf32>
    %79 = arith.addf %61, %78 : vector<2x16xf32>
    %80 = vector.extract_strided_slice %5 {offsets = [11, 0], sizes = [1, 16], strides = [1, 1]} : vector<16x16xf32> to vector<1x16xf32>
    %81 = vector.broadcast %80 : vector<1x16xf32> to vector<2x16xf32>
    %82 = arith.mulf %79, %81 : vector<2x16xf32>
    %cst_10 = arith.constant dense<0.000000e+00> : vector<2xf32>
    %83 = vector.multi_reduction <add>, %82, %cst_10 [1] : vector<2x16xf32> to vector<2xf32>
    %84 = vector.shape_cast %83 : vector<2xf32> to vector<2x1xf32>
    %85 = vector.extract_strided_slice %4 {offsets = [0, 11], sizes = [2, 1], strides = [1, 1]} : vector<2x16xf32> to vector<2x1xf32>
    %86 = arith.subf %85, %84 : vector<2x1xf32>
    %87 = vector.extract_strided_slice %6 {offsets = [0, 11], sizes = [1, 1], strides = [1, 1]} : vector<1x16xf32> to vector<1x1xf32>
    %88 = vector.broadcast %87 : vector<1x1xf32> to vector<2x1xf32>
    %89 = arith.mulf %86, %88 : vector<2x1xf32>
    %c11_i32 = arith.constant 11 : i32
    %90 = vector.broadcast %c11_i32 : i32 to vector<1x16xi32>
    %91 = arith.cmpi eq, %0, %90 : vector<1x16xi32>
    %92 = arith.extui %91 : vector<1x16xi1> to vector<1x16xi32>
    %93 = arith.sitofp %92 : vector<1x16xi32> to vector<1x16xf32>
    %94 = vector.broadcast %89 : vector<2x1xf32> to vector<2x16xf32>
    %95 = vector.broadcast %93 : vector<1x16xf32> to vector<2x16xf32>
    %96 = arith.mulf %94, %95 : vector<2x16xf32>
    %97 = arith.addf %79, %96 : vector<2x16xf32>
    %98 = vector.extract_strided_slice %5 {offsets = [10, 0], sizes = [1, 16], strides = [1, 1]} : vector<16x16xf32> to vector<1x16xf32>
    %99 = vector.broadcast %98 : vector<1x16xf32> to vector<2x16xf32>
    %100 = arith.mulf %97, %99 : vector<2x16xf32>
    %cst_11 = arith.constant dense<0.000000e+00> : vector<2xf32>
    %101 = vector.multi_reduction <add>, %100, %cst_11 [1] : vector<2x16xf32> to vector<2xf32>
    %102 = vector.shape_cast %101 : vector<2xf32> to vector<2x1xf32>
    %103 = vector.extract_strided_slice %4 {offsets = [0, 10], sizes = [2, 1], strides = [1, 1]} : vector<2x16xf32> to vector<2x1xf32>
    %104 = arith.subf %103, %102 : vector<2x1xf32>
    %105 = vector.extract_strided_slice %6 {offsets = [0, 10], sizes = [1, 1], strides = [1, 1]} : vector<1x16xf32> to vector<1x1xf32>
    %106 = vector.broadcast %105 : vector<1x1xf32> to vector<2x1xf32>
    %107 = arith.mulf %104, %106 : vector<2x1xf32>
    %c10_i32 = arith.constant 10 : i32
    %108 = vector.broadcast %c10_i32 : i32 to vector<1x16xi32>
    %109 = arith.cmpi eq, %0, %108 : vector<1x16xi32>
    %110 = arith.extui %109 : vector<1x16xi1> to vector<1x16xi32>
    %111 = arith.sitofp %110 : vector<1x16xi32> to vector<1x16xf32>
    %112 = vector.broadcast %107 : vector<2x1xf32> to vector<2x16xf32>
    %113 = vector.broadcast %111 : vector<1x16xf32> to vector<2x16xf32>
    %114 = arith.mulf %112, %113 : vector<2x16xf32>
    %115 = arith.addf %97, %114 : vector<2x16xf32>
    %116 = vector.extract_strided_slice %5 {offsets = [9, 0], sizes = [1, 16], strides = [1, 1]} : vector<16x16xf32> to vector<1x16xf32>
    %117 = vector.broadcast %116 : vector<1x16xf32> to vector<2x16xf32>
    %118 = arith.mulf %115, %117 : vector<2x16xf32>
    %cst_12 = arith.constant dense<0.000000e+00> : vector<2xf32>
    %119 = vector.multi_reduction <add>, %118, %cst_12 [1] : vector<2x16xf32> to vector<2xf32>
    %120 = vector.shape_cast %119 : vector<2xf32> to vector<2x1xf32>
    %121 = vector.extract_strided_slice %4 {offsets = [0, 9], sizes = [2, 1], strides = [1, 1]} : vector<2x16xf32> to vector<2x1xf32>
    %122 = arith.subf %121, %120 : vector<2x1xf32>
    %123 = vector.extract_strided_slice %6 {offsets = [0, 9], sizes = [1, 1], strides = [1, 1]} : vector<1x16xf32> to vector<1x1xf32>
    %124 = vector.broadcast %123 : vector<1x1xf32> to vector<2x1xf32>
    %125 = arith.mulf %122, %124 : vector<2x1xf32>
    %c9_i32 = arith.constant 9 : i32
    %126 = vector.broadcast %c9_i32 : i32 to vector<1x16xi32>
    %127 = arith.cmpi eq, %0, %126 : vector<1x16xi32>
    %128 = arith.extui %127 : vector<1x16xi1> to vector<1x16xi32>
    %129 = arith.sitofp %128 : vector<1x16xi32> to vector<1x16xf32>
    %130 = vector.broadcast %125 : vector<2x1xf32> to vector<2x16xf32>
    %131 = vector.broadcast %129 : vector<1x16xf32> to vector<2x16xf32>
    %132 = arith.mulf %130, %131 : vector<2x16xf32>
    %133 = arith.addf %115, %132 : vector<2x16xf32>
    %134 = vector.extract_strided_slice %5 {offsets = [8, 0], sizes = [1, 16], strides = [1, 1]} : vector<16x16xf32> to vector<1x16xf32>
    %135 = vector.broadcast %134 : vector<1x16xf32> to vector<2x16xf32>
    %136 = arith.mulf %133, %135 : vector<2x16xf32>
    %cst_13 = arith.constant dense<0.000000e+00> : vector<2xf32>
    %137 = vector.multi_reduction <add>, %136, %cst_13 [1] : vector<2x16xf32> to vector<2xf32>
    %138 = vector.shape_cast %137 : vector<2xf32> to vector<2x1xf32>
    %139 = vector.extract_strided_slice %4 {offsets = [0, 8], sizes = [2, 1], strides = [1, 1]} : vector<2x16xf32> to vector<2x1xf32>
    %140 = arith.subf %139, %138 : vector<2x1xf32>
    %141 = vector.extract_strided_slice %6 {offsets = [0, 8], sizes = [1, 1], strides = [1, 1]} : vector<1x16xf32> to vector<1x1xf32>
    %142 = vector.broadcast %141 : vector<1x1xf32> to vector<2x1xf32>
    %143 = arith.mulf %140, %142 : vector<2x1xf32>
    %c8_i32 = arith.constant 8 : i32
    %144 = vector.broadcast %c8_i32 : i32 to vector<1x16xi32>
    %145 = arith.cmpi eq, %0, %144 : vector<1x16xi32>
    %146 = arith.extui %145 : vector<1x16xi1> to vector<1x16xi32>
    %147 = arith.sitofp %146 : vector<1x16xi32> to vector<1x16xf32>
    %148 = vector.broadcast %143 : vector<2x1xf32> to vector<2x16xf32>
    %149 = vector.broadcast %147 : vector<1x16xf32> to vector<2x16xf32>
    %150 = arith.mulf %148, %149 : vector<2x16xf32>
    %151 = arith.addf %133, %150 : vector<2x16xf32>
    %152 = vector.extract_strided_slice %5 {offsets = [7, 0], sizes = [1, 16], strides = [1, 1]} : vector<16x16xf32> to vector<1x16xf32>
    %153 = vector.broadcast %152 : vector<1x16xf32> to vector<2x16xf32>
    %154 = arith.mulf %151, %153 : vector<2x16xf32>
    %cst_14 = arith.constant dense<0.000000e+00> : vector<2xf32>
    %155 = vector.multi_reduction <add>, %154, %cst_14 [1] : vector<2x16xf32> to vector<2xf32>
    %156 = vector.shape_cast %155 : vector<2xf32> to vector<2x1xf32>
    %157 = vector.extract_strided_slice %4 {offsets = [0, 7], sizes = [2, 1], strides = [1, 1]} : vector<2x16xf32> to vector<2x1xf32>
    %158 = arith.subf %157, %156 : vector<2x1xf32>
    %159 = vector.extract_strided_slice %6 {offsets = [0, 7], sizes = [1, 1], strides = [1, 1]} : vector<1x16xf32> to vector<1x1xf32>
    %160 = vector.broadcast %159 : vector<1x1xf32> to vector<2x1xf32>
    %161 = arith.mulf %158, %160 : vector<2x1xf32>
    %c7_i32 = arith.constant 7 : i32
    %162 = vector.broadcast %c7_i32 : i32 to vector<1x16xi32>
    %163 = arith.cmpi eq, %0, %162 : vector<1x16xi32>
    %164 = arith.extui %163 : vector<1x16xi1> to vector<1x16xi32>
    %165 = arith.sitofp %164 : vector<1x16xi32> to vector<1x16xf32>
    %166 = vector.broadcast %161 : vector<2x1xf32> to vector<2x16xf32>
    %167 = vector.broadcast %165 : vector<1x16xf32> to vector<2x16xf32>
    %168 = arith.mulf %166, %167 : vector<2x16xf32>
    %169 = arith.addf %151, %168 : vector<2x16xf32>
    %170 = vector.extract_strided_slice %5 {offsets = [6, 0], sizes = [1, 16], strides = [1, 1]} : vector<16x16xf32> to vector<1x16xf32>
    %171 = vector.broadcast %170 : vector<1x16xf32> to vector<2x16xf32>
    %172 = arith.mulf %169, %171 : vector<2x16xf32>
    %cst_15 = arith.constant dense<0.000000e+00> : vector<2xf32>
    %173 = vector.multi_reduction <add>, %172, %cst_15 [1] : vector<2x16xf32> to vector<2xf32>
    %174 = vector.shape_cast %173 : vector<2xf32> to vector<2x1xf32>
    %175 = vector.extract_strided_slice %4 {offsets = [0, 6], sizes = [2, 1], strides = [1, 1]} : vector<2x16xf32> to vector<2x1xf32>
    %176 = arith.subf %175, %174 : vector<2x1xf32>
    %177 = vector.extract_strided_slice %6 {offsets = [0, 6], sizes = [1, 1], strides = [1, 1]} : vector<1x16xf32> to vector<1x1xf32>
    %178 = vector.broadcast %177 : vector<1x1xf32> to vector<2x1xf32>
    %179 = arith.mulf %176, %178 : vector<2x1xf32>
    %c6_i32 = arith.constant 6 : i32
    %180 = vector.broadcast %c6_i32 : i32 to vector<1x16xi32>
    %181 = arith.cmpi eq, %0, %180 : vector<1x16xi32>
    %182 = arith.extui %181 : vector<1x16xi1> to vector<1x16xi32>
    %183 = arith.sitofp %182 : vector<1x16xi32> to vector<1x16xf32>
    %184 = vector.broadcast %179 : vector<2x1xf32> to vector<2x16xf32>
    %185 = vector.broadcast %183 : vector<1x16xf32> to vector<2x16xf32>
    %186 = arith.mulf %184, %185 : vector<2x16xf32>
    %187 = arith.addf %169, %186 : vector<2x16xf32>
    %188 = vector.extract_strided_slice %5 {offsets = [5, 0], sizes = [1, 16], strides = [1, 1]} : vector<16x16xf32> to vector<1x16xf32>
    %189 = vector.broadcast %188 : vector<1x16xf32> to vector<2x16xf32>
    %190 = arith.mulf %187, %189 : vector<2x16xf32>
    %cst_16 = arith.constant dense<0.000000e+00> : vector<2xf32>
    %191 = vector.multi_reduction <add>, %190, %cst_16 [1] : vector<2x16xf32> to vector<2xf32>
    %192 = vector.shape_cast %191 : vector<2xf32> to vector<2x1xf32>
    %193 = vector.extract_strided_slice %4 {offsets = [0, 5], sizes = [2, 1], strides = [1, 1]} : vector<2x16xf32> to vector<2x1xf32>
    %194 = arith.subf %193, %192 : vector<2x1xf32>
    %195 = vector.extract_strided_slice %6 {offsets = [0, 5], sizes = [1, 1], strides = [1, 1]} : vector<1x16xf32> to vector<1x1xf32>
    %196 = vector.broadcast %195 : vector<1x1xf32> to vector<2x1xf32>
    %197 = arith.mulf %194, %196 : vector<2x1xf32>
    %c5_i32 = arith.constant 5 : i32
    %198 = vector.broadcast %c5_i32 : i32 to vector<1x16xi32>
    %199 = arith.cmpi eq, %0, %198 : vector<1x16xi32>
    %200 = arith.extui %199 : vector<1x16xi1> to vector<1x16xi32>
    %201 = arith.sitofp %200 : vector<1x16xi32> to vector<1x16xf32>
    %202 = vector.broadcast %197 : vector<2x1xf32> to vector<2x16xf32>
    %203 = vector.broadcast %201 : vector<1x16xf32> to vector<2x16xf32>
    %204 = arith.mulf %202, %203 : vector<2x16xf32>
    %205 = arith.addf %187, %204 : vector<2x16xf32>
    %206 = vector.extract_strided_slice %5 {offsets = [4, 0], sizes = [1, 16], strides = [1, 1]} : vector<16x16xf32> to vector<1x16xf32>
    %207 = vector.broadcast %206 : vector<1x16xf32> to vector<2x16xf32>
    %208 = arith.mulf %205, %207 : vector<2x16xf32>
    %cst_17 = arith.constant dense<0.000000e+00> : vector<2xf32>
    %209 = vector.multi_reduction <add>, %208, %cst_17 [1] : vector<2x16xf32> to vector<2xf32>
    %210 = vector.shape_cast %209 : vector<2xf32> to vector<2x1xf32>
    %211 = vector.extract_strided_slice %4 {offsets = [0, 4], sizes = [2, 1], strides = [1, 1]} : vector<2x16xf32> to vector<2x1xf32>
    %212 = arith.subf %211, %210 : vector<2x1xf32>
    %213 = vector.extract_strided_slice %6 {offsets = [0, 4], sizes = [1, 1], strides = [1, 1]} : vector<1x16xf32> to vector<1x1xf32>
    %214 = vector.broadcast %213 : vector<1x1xf32> to vector<2x1xf32>
    %215 = arith.mulf %212, %214 : vector<2x1xf32>
    %c4_i32 = arith.constant 4 : i32
    %216 = vector.broadcast %c4_i32 : i32 to vector<1x16xi32>
    %217 = arith.cmpi eq, %0, %216 : vector<1x16xi32>
    %218 = arith.extui %217 : vector<1x16xi1> to vector<1x16xi32>
    %219 = arith.sitofp %218 : vector<1x16xi32> to vector<1x16xf32>
    %220 = vector.broadcast %215 : vector<2x1xf32> to vector<2x16xf32>
    %221 = vector.broadcast %219 : vector<1x16xf32> to vector<2x16xf32>
    %222 = arith.mulf %220, %221 : vector<2x16xf32>
    %223 = arith.addf %205, %222 : vector<2x16xf32>
    %224 = vector.extract_strided_slice %5 {offsets = [3, 0], sizes = [1, 16], strides = [1, 1]} : vector<16x16xf32> to vector<1x16xf32>
    %225 = vector.broadcast %224 : vector<1x16xf32> to vector<2x16xf32>
    %226 = arith.mulf %223, %225 : vector<2x16xf32>
    %cst_18 = arith.constant dense<0.000000e+00> : vector<2xf32>
    %227 = vector.multi_reduction <add>, %226, %cst_18 [1] : vector<2x16xf32> to vector<2xf32>
    %228 = vector.shape_cast %227 : vector<2xf32> to vector<2x1xf32>
    %229 = vector.extract_strided_slice %4 {offsets = [0, 3], sizes = [2, 1], strides = [1, 1]} : vector<2x16xf32> to vector<2x1xf32>
    %230 = arith.subf %229, %228 : vector<2x1xf32>
    %231 = vector.extract_strided_slice %6 {offsets = [0, 3], sizes = [1, 1], strides = [1, 1]} : vector<1x16xf32> to vector<1x1xf32>
    %232 = vector.broadcast %231 : vector<1x1xf32> to vector<2x1xf32>
    %233 = arith.mulf %230, %232 : vector<2x1xf32>
    %c3_i32 = arith.constant 3 : i32
    %234 = vector.broadcast %c3_i32 : i32 to vector<1x16xi32>
    %235 = arith.cmpi eq, %0, %234 : vector<1x16xi32>
    %236 = arith.extui %235 : vector<1x16xi1> to vector<1x16xi32>
    %237 = arith.sitofp %236 : vector<1x16xi32> to vector<1x16xf32>
    %238 = vector.broadcast %233 : vector<2x1xf32> to vector<2x16xf32>
    %239 = vector.broadcast %237 : vector<1x16xf32> to vector<2x16xf32>
    %240 = arith.mulf %238, %239 : vector<2x16xf32>
    %241 = arith.addf %223, %240 : vector<2x16xf32>
    %242 = vector.extract_strided_slice %5 {offsets = [2, 0], sizes = [1, 16], strides = [1, 1]} : vector<16x16xf32> to vector<1x16xf32>
    %243 = vector.broadcast %242 : vector<1x16xf32> to vector<2x16xf32>
    %244 = arith.mulf %241, %243 : vector<2x16xf32>
    %cst_19 = arith.constant dense<0.000000e+00> : vector<2xf32>
    %245 = vector.multi_reduction <add>, %244, %cst_19 [1] : vector<2x16xf32> to vector<2xf32>
    %246 = vector.shape_cast %245 : vector<2xf32> to vector<2x1xf32>
    %247 = vector.extract_strided_slice %4 {offsets = [0, 2], sizes = [2, 1], strides = [1, 1]} : vector<2x16xf32> to vector<2x1xf32>
    %248 = arith.subf %247, %246 : vector<2x1xf32>
    %249 = vector.extract_strided_slice %6 {offsets = [0, 2], sizes = [1, 1], strides = [1, 1]} : vector<1x16xf32> to vector<1x1xf32>
    %250 = vector.broadcast %249 : vector<1x1xf32> to vector<2x1xf32>
    %251 = arith.mulf %248, %250 : vector<2x1xf32>
    %c2_i32 = arith.constant 2 : i32
    %252 = vector.broadcast %c2_i32 : i32 to vector<1x16xi32>
    %253 = arith.cmpi eq, %0, %252 : vector<1x16xi32>
    %254 = arith.extui %253 : vector<1x16xi1> to vector<1x16xi32>
    %255 = arith.sitofp %254 : vector<1x16xi32> to vector<1x16xf32>
    %256 = vector.broadcast %251 : vector<2x1xf32> to vector<2x16xf32>
    %257 = vector.broadcast %255 : vector<1x16xf32> to vector<2x16xf32>
    %258 = arith.mulf %256, %257 : vector<2x16xf32>
    %259 = arith.addf %241, %258 : vector<2x16xf32>
    %260 = vector.extract_strided_slice %5 {offsets = [1, 0], sizes = [1, 16], strides = [1, 1]} : vector<16x16xf32> to vector<1x16xf32>
    %261 = vector.broadcast %260 : vector<1x16xf32> to vector<2x16xf32>
    %262 = arith.mulf %259, %261 : vector<2x16xf32>
    %cst_20 = arith.constant dense<0.000000e+00> : vector<2xf32>
    %263 = vector.multi_reduction <add>, %262, %cst_20 [1] : vector<2x16xf32> to vector<2xf32>
    %264 = vector.shape_cast %263 : vector<2xf32> to vector<2x1xf32>
    %265 = vector.extract_strided_slice %4 {offsets = [0, 1], sizes = [2, 1], strides = [1, 1]} : vector<2x16xf32> to vector<2x1xf32>
    %266 = arith.subf %265, %264 : vector<2x1xf32>
    %267 = vector.extract_strided_slice %6 {offsets = [0, 1], sizes = [1, 1], strides = [1, 1]} : vector<1x16xf32> to vector<1x1xf32>
    %268 = vector.broadcast %267 : vector<1x1xf32> to vector<2x1xf32>
    %269 = arith.mulf %266, %268 : vector<2x1xf32>
    %c1_i32 = arith.constant 1 : i32
    %270 = vector.broadcast %c1_i32 : i32 to vector<1x16xi32>
    %271 = arith.cmpi eq, %0, %270 : vector<1x16xi32>
    %272 = arith.extui %271 : vector<1x16xi1> to vector<1x16xi32>
    %273 = arith.sitofp %272 : vector<1x16xi32> to vector<1x16xf32>
    %274 = vector.broadcast %269 : vector<2x1xf32> to vector<2x16xf32>
    %275 = vector.broadcast %273 : vector<1x16xf32> to vector<2x16xf32>
    %276 = arith.mulf %274, %275 : vector<2x16xf32>
    %277 = arith.addf %259, %276 : vector<2x16xf32>
    %278 = vector.extract_strided_slice %5 {offsets = [0, 0], sizes = [1, 16], strides = [1, 1]} : vector<16x16xf32> to vector<1x16xf32>
    %279 = vector.broadcast %278 : vector<1x16xf32> to vector<2x16xf32>
    %280 = arith.mulf %277, %279 : vector<2x16xf32>
    %cst_21 = arith.constant dense<0.000000e+00> : vector<2xf32>
    %281 = vector.multi_reduction <add>, %280, %cst_21 [1] : vector<2x16xf32> to vector<2xf32>
    %282 = vector.shape_cast %281 : vector<2xf32> to vector<2x1xf32>
    %283 = vector.extract_strided_slice %4 {offsets = [0, 0], sizes = [2, 1], strides = [1, 1]} : vector<2x16xf32> to vector<2x1xf32>
    %284 = arith.subf %283, %282 : vector<2x1xf32>
    %285 = vector.extract_strided_slice %6 {offsets = [0, 0], sizes = [1, 1], strides = [1, 1]} : vector<1x16xf32> to vector<1x1xf32>
    %286 = vector.broadcast %285 : vector<1x1xf32> to vector<2x1xf32>
    %287 = arith.mulf %284, %286 : vector<2x1xf32>
    %c0_i32_22 = arith.constant 0 : i32
    %288 = vector.broadcast %c0_i32_22 : i32 to vector<1x16xi32>
    %289 = arith.cmpi eq, %0, %288 : vector<1x16xi32>
    %290 = arith.extui %289 : vector<1x16xi1> to vector<1x16xi32>
    %291 = arith.sitofp %290 : vector<1x16xi32> to vector<1x16xf32>
    %292 = vector.broadcast %287 : vector<2x1xf32> to vector<2x16xf32>
    %293 = vector.broadcast %291 : vector<1x16xf32> to vector<2x16xf32>
    %294 = arith.mulf %292, %293 : vector<2x16xf32>
    %295 = arith.addf %277, %294 : vector<2x16xf32>
    %c0_23 = arith.constant 0 : index
    %c0_24 = arith.constant 0 : index
    %296 = vector.load %arg5[%c0_23, %c0_24] : memref<16x512xf32, #tpu.memory_space<vmem>>, vector<16x512xf32>
    %cst_25 = arith.constant dense<0.000000e+00> : vector<2x512xf32>
    %297 = tpu.matmul %295, %296, %cst_25 {dimension_numbers = #tpu.dot_dimension_numbers<[1], [0], [0], [1], [0, 0, 1, 1], [], []>} : vector<2x16xf32>, vector<16x512xf32>, vector<2x512xf32> -> vector<2x512xf32>
    %c0_26 = arith.constant 0 : index
    %c0_27 = arith.constant 0 : index
    %298 = vector.load %arg4[%c0_26, %c0_27] : memref<2x512xf32, #tpu.memory_space<vmem>>, vector<2x512xf32>
    tpu.vector_store %arg4[%c0_26, %c0_27], %297 {strides = array<i32>} : memref<2x512xf32, #tpu.memory_space<vmem>>, vector<2x512xf32>,
    return
  }
  func.func @transform_0(%arg0: i32) -> (i32, i32) {
    %c0_i32 = arith.constant 0 : i32
    %c0_i32_0 = arith.constant 0 : i32
    %c0_i32_1 = arith.constant 0 : i32
    return %c0_i32, %c0_i32_0 : i32, i32
  }
  func.func @transform_1(%arg0: i32) -> (i32, i32) {
    %c0_i32 = arith.constant 0 : i32
    %c0_i32_0 = arith.constant 0 : i32
    %c0_i32_1 = arith.constant 0 : i32
    return %c0_i32, %c0_i32_0 : i32, i32
  }
  func.func @transform_2(%arg0: i32) -> (i32, i32) {
    %c0_i32 = arith.constant 0 : i32
    %c0_i32_0 = arith.constant 0 : i32
    return %arg0, %c0_i32 : i32, i32
  }
  func.func @transform_3(%arg0: i32) -> (i32, i32) {
    %c0_i32 = arith.constant 0 : i32
    %c0_i32_0 = arith.constant 0 : i32
    return %arg0, %c0_i32 : i32, i32
  }
}

</mosaic_0001>

<llo_original>
// kernel: tpu_custom_call.1
$region0: #{tpu_custom_call.1}
  #allocation0 [shape = 'u32[]', space=smem, size = 0x4, offset = 0x4, fixed_abs, tag = 'smem constant byte address 0x4 - core index']
  #allocation1 [shape = 'u32[144,128]{1,0:T(1,128)}', space=vmem, size = 0x12000, scoped, tag = 'internal scratch']
  #allocation2 [shape = 'f32[16,512]{1,0:T(8,128)}', space=vmem, size = 0x8000, scoped, tag = 'scratch operand']
  #allocation3 [shape = 'f32[16,16]{1,0:T(8,128)}', space=vmem, size = 0x2000, scoped, tag = 'scratch operand']
  #allocation4 [shape = 'f32[1,16]{1,0:T(1,128)}', space=vmem, size = 0x200, scoped, tag = 'scratch operand']
  %s0 = inlined_call_operand.vmem [shape: f32[512,12], index: 0, kind: input, shape index: {}]
  %s1 = inlined_call_operand.vmem [shape: f32[512,4], index: 1, kind: input, shape index: {}]
  %s2 = inlined_call_operand.vmem [shape: f32[2,16], index: 2, kind: input, shape index: {}]
  %s3 = inlined_call_operand.hbm [shape: f32[2,512], index: 3, kind: output, shape index: {}]
  %s4 = sld [smem:[#allocation0]]
  $region26: #{tpu_custom_call.1} parent=0
    _
  %s6 = ssub.s32 1, %s4
  %s7 = scalar_select 0, %s6, %s4
  $region1: #{tpu_custom_call.1} parent=0
    #allocation5 [shape = 'u8[4096]{0}', space=vmem, size = 0x1000, scoped, tag = 'output window, operand 0, single buffered']
    #allocation6 [shape = 's32[1]{0}', space=sflag, size = 0x4, scoped, tag = 'scoped memory for tpu_custom_call.1']
    %8 = vsyncpa [#allocation6], 0
    // Predicated region
    $region2: #{tpu_custom_call.1} parent=1 // pred_check
      _
    $region3: #{tpu_custom_call.1} parent=1 // pred_check_branch
      %10 = sbr.rel (0) target = $region5
    $region4: #{tpu_custom_call.1} parent=1 // pred_region
      _
    $region5: #{tpu_custom_call.1} parent=1 // pred_fallthru
      _
    // Predicated region
    $region6: #{tpu_custom_call.1} parent=1 // pred_check
      _
    $region7: #{tpu_custom_call.1} parent=1 // pred_check_branch
      %12 = sbr.rel (0) target = $region9
    $region8: #{tpu_custom_call.1} parent=1 // pred_region
      _
    $region9: #{tpu_custom_call.1} parent=1 // pred_fallthru
      _
    // Predicated region
    $region10: #{tpu_custom_call.1} parent=1 // pred_check
      _
    $region11: #{tpu_custom_call.1} parent=1 // pred_check_branch
      %14 = sbr.rel (0) target = $region13
    $region12: #{tpu_custom_call.1} parent=1 // pred_region
      _
    $region13: #{tpu_custom_call.1} parent=1 // pred_fallthru
      _
    %v15 = vlaneseq
    %v16 = vand.u32 %v15, 127
    %p17 = scmp.eq.s32.totalorder 0, 0
    // Predicated region
    $region14: #{tpu_custom_call.1} parent=1 // pred_check
      %p18 = pneg %p17
    $region15: #{tpu_custom_call.1} parent=1 // pred_check_branch
      %20 = sbr.rel (%p18) target = $region17
    $region16: #{tpu_custom_call.1} parent=1 // pred_region
      %v21 = vlaneseq
      %v22 = vshrl.u32 %v21, 7
      %v23 = vadd.s32 %v22, 8
      %v24 = vld [vmem:[%s0] sm:$0xff]
      %v25 = vld [vmem:[%s0 + $0x8] sm:$0xff]
      %v26 = vld [vmem:[%s0 + $0x10] sm:$0xff]
      %v27 = vld [vmem:[%s0 + $0x18] sm:$0xff]
      %v28 = vld [vmem:[%s0 + $0x20] sm:$0xff]
      %v29 = vld [vmem:[%s0 + $0x28] sm:$0xff]
      %v30 = vld [vmem:[%s0 + $0x30] sm:$0xff]
      %v31 = vld [vmem:[%s0 + $0x38] sm:$0xff]
      %v32 = vld [vmem:[%s0 + $0x40] sm:$0xff]
      %v33 = vld [vmem:[%s0 + $0x48] sm:$0xff]
      %v34 = vld [vmem:[%s0 + $0x50] sm:$0xff]
      %v35 = vld [vmem:[%s0 + $0x58] sm:$0xff]
      %v36 = vld [vmem:[%s0 + $0x60] sm:$0xff]
      %v37 = vld [vmem:[%s0 + $0x68] sm:$0xff]
      %v38 = vld [vmem:[%s0 + $0x70] sm:$0xff]
      %v39 = vld [vmem:[%s0 + $0x78] sm:$0xff]
      %v40 = vld [vmem:[%s0 + $0x80] sm:$0xff]
      %v41 = vld [vmem:[%s0 + $0x88] sm:$0xff]
      %v42 = vld [vmem:[%s0 + $0x90] sm:$0xff]
      %v43 = vld [vmem:[%s0 + $0x98] sm:$0xff]
      %v44 = vld [vmem:[%s0 + $0xa0] sm:$0xff]
      %v45 = vld [vmem:[%s0 + $0xa8] sm:$0xff]
      %v46 = vld [vmem:[%s0 + $0xb0] sm:$0xff]
      %v47 = vld [vmem:[%s0 + $0xb8] sm:$0xff]
      %v48 = vld [vmem:[%s0 + $0xc0] sm:$0xff]
      %v49 = vld [vmem:[%s0 + $0xc8] sm:$0xff]
      %v50 = vld [vmem:[%s0 + $0xd0] sm:$0xff]
      %v51 = vld [vmem:[%s0 + $0xd8] sm:$0xff]
      %v52 = vld [vmem:[%s0 + $0xe0] sm:$0xff]
      %v53 = vld [vmem:[%s0 + $0xe8] sm:$0xff]
      %v54 = vld [vmem:[%s0 + $0xf0] sm:$0xff]
      %v55 = vld [vmem:[%s0 + $0xf8] sm:$0xff]
      %v56 = vld [vmem:[%s0 + $0x100] sm:$0xff]
      %v57 = vld [vmem:[%s0 + $0x108] sm:$0xff]
      %v58 = vld [vmem:[%s0 + $0x110] sm:$0xff]
      %v59 = vld [vmem:[%s0 + $0x118] sm:$0xff]
      %v60 = vld [vmem:[%s0 + $0x120] sm:$0xff]
      %v61 = vld [vmem:[%s0 + $0x128] sm:$0xff]
      %v62 = vld [vmem:[%s0 + $0x130] sm:$0xff]
      %v63 = vld [vmem:[%s0 + $0x138] sm:$0xff]
      %v64 = vld [vmem:[%s0 + $0x140] sm:$0xff]
      %v65 = vld [vmem:[%s0 + $0x148] sm:$0xff]
      %v66 = vld [vmem:[%s0 + $0x150] sm:$0xff]
      %v67 = vld [vmem:[%s0 + $0x158] sm:$0xff]
      %v68 = vld [vmem:[%s0 + $0x160] sm:$0xff]
      %v69 = vld [vmem:[%s0 + $0x168] sm:$0xff]
      %v70 = vld [vmem:[%s0 + $0x170] sm:$0xff]
      %v71 = vld [vmem:[%s0 + $0x178] sm:$0xff]
      %v72 = vld [vmem:[%s0 + $0x180] sm:$0xff]
      %v73 = vld [vmem:[%s0 + $0x188] sm:$0xff]
      %v74 = vld [vmem:[%s0 + $0x190] sm:$0xff]
      %v75 = vld [vmem:[%s0 + $0x198] sm:$0xff]
      %v76 = vld [vmem:[%s0 + $0x1a0] sm:$0xff]
      %v77 = vld [vmem:[%s0 + $0x1a8] sm:$0xff]
      %v78 = vld [vmem:[%s0 + $0x1b0] sm:$0xff]
      %v79 = vld [vmem:[%s0 + $0x1b8] sm:$0xff]
      %v80 = vld [vmem:[%s0 + $0x1c0] sm:$0xff]
      %v81 = vld [vmem:[%s0 + $0x1c8] sm:$0xff]
      %v82 = vld [vmem:[%s0 + $0x1d0] sm:$0xff]
      %v83 = vld [vmem:[%s0 + $0x1d8] sm:$0xff]
      %v84 = vld [vmem:[%s0 + $0x1e0] sm:$0xff]
      %v85 = vld [vmem:[%s0 + $0x1e8] sm:$0xff]
      %v86 = vld [vmem:[%s0 + $0x1f0] sm:$0xff]
      %v87 = vld [vmem:[%s0 + $0x1f8] sm:$0xff]
      %v88 = vld [vmem:[%s1] sm:$0xff]
      %v89 = vld [vmem:[%s1 + $0x8] sm:$0xff]
      %v90 = vld [vmem:[%s1 + $0x10] sm:$0xff]
      %v91 = vld [vmem:[%s1 + $0x18] sm:$0xff]
      %v92 = vld [vmem:[%s1 + $0x20] sm:$0xff]
      %v93 = vld [vmem:[%s1 + $0x28] sm:$0xff]
      %v94 = vld [vmem:[%s1 + $0x30] sm:$0xff]
      %v95 = vld [vmem:[%s1 + $0x38] sm:$0xff]
      %v96 = vld [vmem:[%s1 + $0x40] sm:$0xff]
      %v97 = vld [vmem:[%s1 + $0x48] sm:$0xff]
      %v98 = vld [vmem:[%s1 + $0x50] sm:$0xff]
      %v99 = vld [vmem:[%s1 + $0x58] sm:$0xff]
      %v100 = vld [vmem:[%s1 + $0x60] sm:$0xff]
      %v101 = vld [vmem:[%s1 + $0x68] sm:$0xff]
      %v102 = vld [vmem:[%s1 + $0x70] sm:$0xff]
      %v103 = vld [vmem:[%s1 + $0x78] sm:$0xff]
      %v104 = vld [vmem:[%s1 + $0x80] sm:$0xff]
      %v105 = vld [vmem:[%s1 + $0x88] sm:$0xff]
      %v106 = vld [vmem:[%s1 + $0x90] sm:$0xff]
      %v107 = vld [vmem:[%s1 + $0x98] sm:$0xff]
      %v108 = vld [vmem:[%s1 + $0xa0] sm:$0xff]
      %v109 = vld [vmem:[%s1 + $0xa8] sm:$0xff]
      %v110 = vld [vmem:[%s1 + $0xb0] sm:$0xff]
      %v111 = vld [vmem:[%s1 + $0xb8] sm:$0xff]
      %v112 = vld [vmem:[%s1 + $0xc0] sm:$0xff]
      %v113 = vld [vmem:[%s1 + $0xc8] sm:$0xff]
      %v114 = vld [vmem:[%s1 + $0xd0] sm:$0xff]
      %v115 = vld [vmem:[%s1 + $0xd8] sm:$0xff]
      %v116 = vld [vmem:[%s1 + $0xe0] sm:$0xff]
      %v117 = vld [vmem:[%s1 + $0xe8] sm:$0xff]
      %v118 = vld [vmem:[%s1 + $0xf0] sm:$0xff]
      %v119 = vld [vmem:[%s1 + $0xf8] sm:$0xff]
      %v120 = vld [vmem:[%s1 + $0x100] sm:$0xff]
      %v121 = vld [vmem:[%s1 + $0x108] sm:$0xff]
      %v122 = vld [vmem:[%s1 + $0x110] sm:$0xff]
      %v123 = vld [vmem:[%s1 + $0x118] sm:$0xff]
      %v124 = vld [vmem:[%s1 + $0x120] sm:$0xff]
      %v125 = vld [vmem:[%s1 + $0x128] sm:$0xff]
      %v126 = vld [vmem:[%s1 + $0x130] sm:$0xff]
      %v127 = vld [vmem:[%s1 + $0x138] sm:$0xff]
      %v128 = vld [vmem:[%s1 + $0x140] sm:$0xff]
      %v129 = vld [vmem:[%s1 + $0x148] sm:$0xff]
      %v130 = vld [vmem:[%s1 + $0x150] sm:$0xff]
      %v131 = vld [vmem:[%s1 + $0x158] sm:$0xff]
      %v132 = vld [vmem:[%s1 + $0x160] sm:$0xff]
      %v133 = vld [vmem:[%s1 + $0x168] sm:$0xff]
      %v134 = vld [vmem:[%s1 + $0x170] sm:$0xff]
      %v135 = vld [vmem:[%s1 + $0x178] sm:$0xff]
      %v136 = vld [vmem:[%s1 + $0x180] sm:$0xff]
      %v137 = vld [vmem:[%s1 + $0x188] sm:$0xff]
      %v138 = vld [vmem:[%s1 + $0x190] sm:$0xff]
      %v139 = vld [vmem:[%s1 + $0x198] sm:$0xff]
      %v140 = vld [vmem:[%s1 + $0x1a0] sm:$0xff]
      %v141 = vld [vmem:[%s1 + $0x1a8] sm:$0xff]
      %v142 = vld [vmem:[%s1 + $0x1b0] sm:$0xff]
      %v143 = vld [vmem:[%s1 + $0x1b8] sm:$0xff]
      %v144 = vld [vmem:[%s1 + $0x1c0] sm:$0xff]
      %v145 = vld [vmem:[%s1 + $0x1c8] sm:$0xff]
      %v146 = vld [vmem:[%s1 + $0x1d0] sm:$0xff]
      %v147 = vld [vmem:[%s1 + $0x1d8] sm:$0xff]
      %v148 = vld [vmem:[%s1 + $0x1e0] sm:$0xff]
      %v149 = vld [vmem:[%s1 + $0x1e8] sm:$0xff]
      %v150 = vld [vmem:[%s1 + $0x1f0] sm:$0xff]
      %v151 = vld [vmem:[%s1 + $0x1f8] sm:$0xff]
      %216 = vrot.lane.b32.xlu0 %v88, 12
      %v217 = vpop.permute.xlu0 %216
      %218 = vrot.lane.b32.xlu0 %v89, 12
      %v219 = vpop.permute.xlu0 %218
      %220 = vrot.lane.b32.xlu0 %v90, 12
      %v221 = vpop.permute.xlu0 %220
      %222 = vrot.lane.b32.xlu0 %v91, 12
      %v223 = vpop.permute.xlu0 %222
      %224 = vrot.lane.b32.xlu0 %v92, 12
      %v225 = vpop.permute.xlu0 %224
      %226 = vrot.lane.b32.xlu0 %v93, 12
      %v227 = vpop.permute.xlu0 %226
      %228 = vrot.lane.b32.xlu0 %v94, 12
      %v229 = vpop.permute.xlu0 %228
      %230 = vrot.lane.b32.xlu0 %v95, 12
      %v231 = vpop.permute.xlu0 %230
      %232 = vrot.lane.b32.xlu0 %v96, 12
      %v233 = vpop.permute.xlu0 %232
      %234 = vrot.lane.b32.xlu0 %v97, 12
      %v235 = vpop.permute.xlu0 %234
      %236 = vrot.lane.b32.xlu0 %v98, 12
      %v237 = vpop.permute.xlu0 %236
      %238 = vrot.lane.b32.xlu0 %v99, 12
      %v239 = vpop.permute.xlu0 %238
      %240 = vrot.lane.b32.xlu0 %v100, 12
      %v241 = vpop.permute.xlu0 %240
      %242 = vrot.lane.b32.xlu0 %v101, 12
      %v243 = vpop.permute.xlu0 %242
      %244 = vrot.lane.b32.xlu0 %v102, 12
      %v245 = vpop.permute.xlu0 %244
      %246 = vrot.lane.b32.xlu0 %v103, 12
      %v247 = vpop.permute.xlu0 %246
      %248 = vrot.lane.b32.xlu0 %v104, 12
      %v249 = vpop.permute.xlu0 %248
      %250 = vrot.lane.b32.xlu0 %v105, 12
      %v251 = vpop.permute.xlu0 %250
      %252 = vrot.lane.b32.xlu0 %v106, 12
      %v253 = vpop.permute.xlu0 %252
      %254 = vrot.lane.b32.xlu0 %v107, 12
      %v255 = vpop.permute.xlu0 %254
      %256 = vrot.lane.b32.xlu0 %v108, 12
      %v257 = vpop.permute.xlu0 %256
      %258 = vrot.lane.b32.xlu0 %v109, 12
      %v259 = vpop.permute.xlu0 %258
      %260 = vrot.lane.b32.xlu0 %v110, 12
      %v261 = vpop.permute.xlu0 %260
      %262 = vrot.lane.b32.xlu0 %v111, 12
      %v263 = vpop.permute.xlu0 %262
      %264 = vrot.lane.b32.xlu0 %v112, 12
      %v265 = vpop.permute.xlu0 %264
      %266 = vrot.lane.b32.xlu0 %v113, 12
      %v267 = vpop.permute.xlu0 %266
      %268 = vrot.lane.b32.xlu0 %v114, 12
      %v269 = vpop.permute.xlu0 %268
      %270 = vrot.lane.b32.xlu0 %v115, 12
      %v271 = vpop.permute.xlu0 %270
      %272 = vrot.lane.b32.xlu0 %v116, 12
      %v273 = vpop.permute.xlu0 %272
      %274 = vrot.lane.b32.xlu0 %v117, 12
      %v275 = vpop.permute.xlu0 %274
      %276 = vrot.lane.b32.xlu0 %v118, 12
      %v277 = vpop.permute.xlu0 %276
      %278 = vrot.lane.b32.xlu0 %v119, 12
      %v279 = vpop.permute.xlu0 %278
      %280 = vrot.lane.b32.xlu0 %v120, 12
      %v281 = vpop.permute.xlu0 %280
      %282 = vrot.lane.b32.xlu0 %v121, 12
      %v283 = vpop.permute.xlu0 %282
      %284 = vrot.lane.b32.xlu0 %v122, 12
      %v285 = vpop.permute.xlu0 %284
      %286 = vrot.lane.b32.xlu0 %v123, 12
      %v287 = vpop.permute.xlu0 %286
      %288 = vrot.lane.b32.xlu0 %v124, 12
      %v289 = vpop.permute.xlu0 %288
      %290 = vrot.lane.b32.xlu0 %v125, 12
      %v291 = vpop.permute.xlu0 %290
      %292 = vrot.lane.b32.xlu0 %v126, 12
      %v293 = vpop.permute.xlu0 %292
      %294 = vrot.lane.b32.xlu0 %v127, 12
      %v295 = vpop.permute.xlu0 %294
      %296 = vrot.lane.b32.xlu0 %v128, 12
      %v297 = vpop.permute.xlu0 %296
      %298 = vrot.lane.b32.xlu0 %v129, 12
      %v299 = vpop.permute.xlu0 %298
      %300 = vrot.lane.b32.xlu0 %v130, 12
      %v301 = vpop.permute.xlu0 %300
      %302 = vrot.lane.b32.xlu0 %v131, 12
      %v303 = vpop.permute.xlu0 %302
      %304 = vrot.lane.b32.xlu0 %v132, 12
      %v305 = vpop.permute.xlu0 %304
      %306 = vrot.lane.b32.xlu0 %v133, 12
      %v307 = vpop.permute.xlu0 %306
      %308 = vrot.lane.b32.xlu0 %v134, 12
      %v309 = vpop.permute.xlu0 %308
      %310 = vrot.lane.b32.xlu0 %v135, 12
      %v311 = vpop.permute.xlu0 %310
      %312 = vrot.lane.b32.xlu0 %v136, 12
      %v313 = vpop.permute.xlu0 %312
      %314 = vrot.lane.b32.xlu0 %v137, 12
      %v315 = vpop.permute.xlu0 %314
      %316 = vrot.lane.b32.xlu0 %v138, 12
      %v317 = vpop.permute.xlu0 %316
      %318 = vrot.lane.b32.xlu0 %v139, 12
      %v319 = vpop.permute.xlu0 %318
      %320 = vrot.lane.b32.xlu0 %v140, 12
      %v321 = vpop.permute.xlu0 %320
      %322 = vrot.lane.b32.xlu0 %v141, 12
      %v323 = vpop.permute.xlu0 %322
      %324 = vrot.lane.b32.xlu0 %v142, 12
      %v325 = vpop.permute.xlu0 %324
      %326 = vrot.lane.b32.xlu0 %v143, 12
      %v327 = vpop.permute.xlu0 %326
      %328 = vrot.lane.b32.xlu0 %v144, 12
      %v329 = vpop.permute.xlu0 %328
      %330 = vrot.lane.b32.xlu0 %v145, 12
      %v331 = vpop.permute.xlu0 %330
      %332 = vrot.lane.b32.xlu0 %v146, 12
      %v333 = vpop.permute.xlu0 %332
      %334 = vrot.lane.b32.xlu0 %v147, 12
      %v335 = vpop.permute.xlu0 %334
      %336 = vrot.lane.b32.xlu0 %v148, 12
      %v337 = vpop.permute.xlu0 %336
      %338 = vrot.lane.b32.xlu0 %v149, 12
      %v339 = vpop.permute.xlu0 %338
      %340 = vrot.lane.b32.xlu0 %v150, 12
      %v341 = vpop.permute.xlu0 %340
      %342 = vrot.lane.b32.xlu0 %v151, 12
      %v343 = vpop.permute.xlu0 %342
      %vm408 = vcmask 97280
      %v409 = vsel %vm408, %v24, %v217
      %v410 = vsel %vm408, %v25, %v219
      %v411 = vsel %vm408, %v26, %v221
      %v412 = vsel %vm408, %v27, %v223
      %v413 = vsel %vm408, %v28, %v225
      %v414 = vsel %vm408, %v29, %v227
      %v415 = vsel %vm408, %v30, %v229
      %v416 = vsel %vm408, %v31, %v231
      %v417 = vsel %vm408, %v32, %v233
      %v418 = vsel %vm408, %v33, %v235
      %v419 = vsel %vm408, %v34, %v237
      %v420 = vsel %vm408, %v35, %v239
      %v421 = vsel %vm408, %v36, %v241
      %v422 = vsel %vm408, %v37, %v243
      %v423 = vsel %vm408, %v38, %v245
      %v424 = vsel %vm408, %v39, %v247
      %v425 = vsel %vm408, %v40, %v249
      %v426 = vsel %vm408, %v41, %v251
      %v427 = vsel %vm408, %v42, %v253
      %v428 = vsel %vm408, %v43, %v255
      %v429 = vsel %vm408, %v44, %v257
      %v430 = vsel %vm408, %v45, %v259
      %v431 = vsel %vm408, %v46, %v261
      %v432 = vsel %vm408, %v47, %v263
      %v433 = vsel %vm408, %v48, %v265
      %v434 = vsel %vm408, %v49, %v267
      %v435 = vsel %vm408, %v50, %v269
      %v436 = vsel %vm408, %v51, %v271
      %v437 = vsel %vm408, %v52, %v273
      %v438 = vsel %vm408, %v53, %v275
      %v439 = vsel %vm408, %v54, %v277
      %v440 = vsel %vm408, %v55, %v279
      %v441 = vsel %vm408, %v56, %v281
      %v442 = vsel %vm408, %v57, %v283
      %v443 = vsel %vm408, %v58, %v285
      %v444 = vsel %vm408, %v59, %v287
      %v445 = vsel %vm408, %v60, %v289
      %v446 = vsel %vm408, %v61, %v291
      %v447 = vsel %vm408, %v62, %v293
      %v448 = vsel %vm408, %v63, %v295
      %v449 = vsel %vm408, %v64, %v297
      %v450 = vsel %vm408, %v65, %v299
      %v451 = vsel %vm408, %v66, %v301
      %v452 = vsel %vm408, %v67, %v303
      %v453 = vsel %vm408, %v68, %v305
      %v454 = vsel %vm408, %v69, %v307
      %v455 = vsel %vm408, %v70, %v309
      %v456 = vsel %vm408, %v71, %v311
      %v457 = vsel %vm408, %v72, %v313
      %v458 = vsel %vm408, %v73, %v315
      %v459 = vsel %vm408, %v74, %v317
      %v460 = vsel %vm408, %v75, %v319
      %v461 = vsel %vm408, %v76, %v321
      %v462 = vsel %vm408, %v77, %v323
      %v463 = vsel %vm408, %v78, %v325
      %v464 = vsel %vm408, %v79, %v327
      %v465 = vsel %vm408, %v80, %v329
      %v466 = vsel %vm408, %v81, %v331
      %v467 = vsel %vm408, %v82, %v333
      %v468 = vsel %vm408, %v83, %v335
      %v469 = vsel %vm408, %v84, %v337
      %v470 = vsel %vm408, %v85, %v339
      %v471 = vsel %vm408, %v86, %v341
      %v472 = vsel %vm408, %v87, %v343
      %v473 = vadd.f32 %v409, 1e-08
      %v474 = vadd.f32 %v410, 1e-08
      %v475 = vadd.f32 %v411, 1e-08
      %v476 = vadd.f32 %v412, 1e-08
      %v477 = vadd.f32 %v413, 1e-08
      %v478 = vadd.f32 %v414, 1e-08
      %v479 = vadd.f32 %v415, 1e-08
      %v480 = vadd.f32 %v416, 1e-08
      %v481 = vadd.f32 %v417, 1e-08
      %v482 = vadd.f32 %v418, 1e-08
      %v483 = vadd.f32 %v419, 1e-08
      %v484 = vadd.f32 %v420, 1e-08
      %v485 = vadd.f32 %v421, 1e-08
      %v486 = vadd.f32 %v422, 1e-08
      %v487 = vadd.f32 %v423, 1e-08
      %v488 = vadd.f32 %v424, 1e-08
      %v489 = vadd.f32 %v425, 1e-08
      %v490 = vadd.f32 %v426, 1e-08
      %v491 = vadd.f32 %v427, 1e-08
      %v492 = vadd.f32 %v428, 1e-08
      %v493 = vadd.f32 %v429, 1e-08
      %v494 = vadd.f32 %v430, 1e-08
      %v495 = vadd.f32 %v431, 1e-08
      %v496 = vadd.f32 %v432, 1e-08
      %v497 = vadd.f32 %v433, 1e-08
      %v498 = vadd.f32 %v434, 1e-08
      %v499 = vadd.f32 %v435, 1e-08
      %v500 = vadd.f32 %v436, 1e-08
      %v501 = vadd.f32 %v437, 1e-08
      %v502 = vadd.f32 %v438, 1e-08
      %v503 = vadd.f32 %v439, 1e-08
      %v504 = vadd.f32 %v440, 1e-08
      %v505 = vadd.f32 %v441, 1e-08
      %v506 = vadd.f32 %v442, 1e-08
      %v507 = vadd.f32 %v443, 1e-08
      %v508 = vadd.f32 %v444, 1e-08
      %v509 = vadd.f32 %v445, 1e-08
      %v510 = vadd.f32 %v446, 1e-08
      %v511 = vadd.f32 %v447, 1e-08
      %v512 = vadd.f32 %v448, 1e-08
      %v513 = vadd.f32 %v449, 1e-08
      %v514 = vadd.f32 %v450, 1e-08
      %v515 = vadd.f32 %v451, 1e-08
      %v516 = vadd.f32 %v452, 1e-08
      %v517 = vadd.f32 %v453, 1e-08
      %v518 = vadd.f32 %v454, 1e-08
      %v519 = vadd.f32 %v455, 1e-08
      %v520 = vadd.f32 %v456, 1e-08
      %v521 = vadd.f32 %v457, 1e-08
      %v522 = vadd.f32 %v458, 1e-08
      %v523 = vadd.f32 %v459, 1e-08
      %v524 = vadd.f32 %v460, 1e-08
      %v525 = vadd.f32 %v461, 1e-08
      %v526 = vadd.f32 %v462, 1e-08
      %v527 = vadd.f32 %v463, 1e-08
      %v528 = vadd.f32 %v464, 1e-08
      %v529 = vadd.f32 %v465, 1e-08
      %v530 = vadd.f32 %v466, 1e-08
      %v531 = vadd.f32 %v467, 1e-08
      %v532 = vadd.f32 %v468, 1e-08
      %v533 = vadd.f32 %v469, 1e-08
      %v534 = vadd.f32 %v470, 1e-08
      %v535 = vadd.f32 %v471, 1e-08
      %v536 = vadd.f32 %v472, 1e-08
      %537 = vxpose.xlu0.b32.start [1/16] %v473, 128
      %538 = vxpose.xlu0.b32.cont [2/16] %v474, 128
      %539 = vxpose.xlu0.b32.cont [3/16] %v475, 128
      %540 = vxpose.xlu0.b32.cont [4/16] %v476, 128
      %541 = vxpose.xlu0.b32.cont [5/16] %v477, 128
      %542 = vxpose.xlu0.b32.cont [6/16] %v478, 128
      %543 = vxpose.xlu0.b32.cont [7/16] %v479, 128
      %544 = vxpose.xlu0.b32.cont [8/16] %v480, 128
      %545 = vxpose.xlu0.b32.cont [9/16] %v481, 128
      %546 = vxpose.xlu0.b32.cont [10/16] %v482, 128
      %547 = vxpose.xlu0.b32.cont [11/16] %v483, 128
      %548 = vxpose.xlu0.b32.cont [12/16] %v484, 128
      %549 = vxpose.xlu0.b32.cont [13/16] %v485, 128
      %550 = vxpose.xlu0.b32.cont [14/16] %v486, 128
      %551 = vxpose.xlu0.b32.cont [15/16] %v487, 128
      %552 = vxpose.xlu0.b32.end [16/16] %v488, 128
      %v553 = vpop.trf.xlu0
      %v554 = vpop.trf.xlu0
      %v555 = vpop.trf.xlu0
      %v556 = vpop.trf.xlu0
      %v557 = vpop.trf.xlu0
      %v558 = vpop.trf.xlu0
      %v559 = vpop.trf.xlu0
      %v560 = vpop.trf.xlu0
      %v561 = vpop.trf.xlu0
      %v562 = vpop.trf.xlu0
      %v563 = vpop.trf.xlu0
      %v564 = vpop.trf.xlu0
      %v565 = vpop.trf.xlu0
      %v566 = vpop.trf.xlu0
      %v567 = vpop.trf.xlu0
      %v568 = vpop.trf.xlu0
      %569 = vxpose.xlu0.b32.start [1/16] %v489, 128
      %570 = vxpose.xlu0.b32.cont [2/16] %v490, 128
      %571 = vxpose.xlu0.b32.cont [3/16] %v491, 128
      %572 = vxpose.xlu0.b32.cont [4/16] %v492, 128
      %573 = vxpose.xlu0.b32.cont [5/16] %v493, 128
      %574 = vxpose.xlu0.b32.cont [6/16] %v494, 128
      %575 = vxpose.xlu0.b32.cont [7/16] %v495, 128
      %576 = vxpose.xlu0.b32.cont [8/16] %v496, 128
      %577 = vxpose.xlu0.b32.cont [9/16] %v497, 128
      %578 = vxpose.xlu0.b32.cont [10/16] %v498, 128
      %579 = vxpose.xlu0.b32.cont [11/16] %v499, 128
      %580 = vxpose.xlu0.b32.cont [12/16] %v500, 128
      %581 = vxpose.xlu0.b32.cont [13/16] %v501, 128
      %582 = vxpose.xlu0.b32.cont [14/16] %v502, 128
      %583 = vxpose.xlu0.b32.cont [15/16] %v503, 128
      %584 = vxpose.xlu0.b32.end [16/16] %v504, 128
      %v585 = vpop.trf.xlu0
      %v586 = vpop.trf.xlu0
      %v587 = vpop.trf.xlu0
      %v588 = vpop.trf.xlu0
      %v589 = vpop.trf.xlu0
      %v590 = vpop.trf.xlu0
      %v591 = vpop.trf.xlu0
      %v592 = vpop.trf.xlu0
      %v593 = vpop.trf.xlu0
      %v594 = vpop.trf.xlu0
      %v595 = vpop.trf.xlu0
      %v596 = vpop.trf.xlu0
      %v597 = vpop.trf.xlu0
      %v598 = vpop.trf.xlu0
      %v599 = vpop.trf.xlu0
      %v600 = vpop.trf.xlu0
      %601 = vxpose.xlu0.b32.start [1/16] %v505, 128
      %602 = vxpose.xlu0.b32.cont [2/16] %v506, 128
      %603 = vxpose.xlu0.b32.cont [3/16] %v507, 128
      %604 = vxpose.xlu0.b32.cont [4/16] %v508, 128
      %605 = vxpose.xlu0.b32.cont [5/16] %v509, 128
      %606 = vxpose.xlu0.b32.cont [6/16] %v510, 128
      %607 = vxpose.xlu0.b32.cont [7/16] %v511, 128
      %608 = vxpose.xlu0.b32.cont [8/16] %v512, 128
      %609 = vxpose.xlu0.b32.cont [9/16] %v513, 128
      %610 = vxpose.xlu0.b32.cont [10/16] %v514, 128
      %611 = vxpose.xlu0.b32.cont [11/16] %v515, 128
      %612 = vxpose.xlu0.b32.cont [12/16] %v516, 128
      %613 = vxpose.xlu0.b32.cont [13/16] %v517, 128
      %614 = vxpose.xlu0.b32.cont [14/16] %v518, 128
      %615 = vxpose.xlu0.b32.cont [15/16] %v519, 128
      %616 = vxpose.xlu0.b32.end [16/16] %v520, 128
      %v617 = vpop.trf.xlu0
      %v618 = vpop.trf.xlu0
      %v619 = vpop.trf.xlu0
      %v620 = vpop.trf.xlu0
      %v621 = vpop.trf.xlu0
      %v622 = vpop.trf.xlu0
      %v623 = vpop.trf.xlu0
      %v624 = vpop.trf.xlu0
      %v625 = vpop.trf.xlu0
      %v626 = vpop.trf.xlu0
      %v627 = vpop.trf.xlu0
      %v628 = vpop.trf.xlu0
      %v629 = vpop.trf.xlu0
      %v630 = vpop.trf.xlu0
      %v631 = vpop.trf.xlu0
      %v632 = vpop.trf.xlu0
      %633 = vxpose.xlu0.b32.start [1/16] %v521, 128
      %634 = vxpose.xlu0.b32.cont [2/16] %v522, 128
      %635 = vxpose.xlu0.b32.cont [3/16] %v523, 128
      %636 = vxpose.xlu0.b32.cont [4/16] %v524, 128
      %637 = vxpose.xlu0.b32.cont [5/16] %v525, 128
      %638 = vxpose.xlu0.b32.cont [6/16] %v526, 128
      %639 = vxpose.xlu0.b32.cont [7/16] %v527, 128
      %640 = vxpose.xlu0.b32.cont [8/16] %v528, 128
      %641 = vxpose.xlu0.b32.cont [9/16] %v529, 128
      %642 = vxpose.xlu0.b32.cont [10/16] %v530, 128
      %643 = vxpose.xlu0.b32.cont [11/16] %v531, 128
      %644 = vxpose.xlu0.b32.cont [12/16] %v532, 128
      %645 = vxpose.xlu0.b32.cont [13/16] %v533, 128
      %646 = vxpose.xlu0.b32.cont [14/16] %v534, 128
      %647 = vxpose.xlu0.b32.cont [15/16] %v535, 128
      %648 = vxpose.xlu0.b32.end [16/16] %v536, 128
      %v649 = vpop.trf.xlu0
      %v650 = vpop.trf.xlu0
      %v651 = vpop.trf.xlu0
      %v652 = vpop.trf.xlu0
      %v653 = vpop.trf.xlu0
      %v654 = vpop.trf.xlu0
      %v655 = vpop.trf.xlu0
      %v656 = vpop.trf.xlu0
      %v657 = vpop.trf.xlu0
      %v658 = vpop.trf.xlu0
      %v659 = vpop.trf.xlu0
      %v660 = vpop.trf.xlu0
      %v661 = vpop.trf.xlu0
      %v662 = vpop.trf.xlu0
      %v663 = vpop.trf.xlu0
      %v664 = vpop.trf.xlu0
      %665 = vst [vmem:[#allocation2] sm:$0xff] %v553
      %666 = vst [vmem:[#allocation2 + $0x8] sm:$0xff] %v585
      %667 = vst [vmem:[#allocation2 + $0x10] sm:$0xff] %v617
      %668 = vst [vmem:[#allocation2 + $0x18] sm:$0xff] %v649
      %669 = vst [vmem:[#allocation2 + $0x20] sm:$0xff] %v554
      %670 = vst [vmem:[#allocation2 + $0x28] sm:$0xff] %v586
      %671 = vst [vmem:[#allocation2 + $0x30] sm:$0xff] %v618
      %672 = vst [vmem:[#allocation2 + $0x38] sm:$0xff] %v650
      %673 = vmatprep.subr.mxu0 0.0
      %674 = vmatpush1.msra.mxu0 %v473
      %675 = vmatprep.subr.mxu0 0.0
      %676 = vmatpush1.msra.mxu0 %v474
      %677 = vmatprep.subr.mxu0 0.0
      %678 = vmatpush1.msra.mxu0 %v475
      %679 = vmatprep.subr.mxu0 0.0
      %680 = vmatpush1.msra.mxu0 %v476
      %681 = vmatprep.subr.mxu0 0.0
      %682 = vmatpush1.msra.mxu0 %v477
      %683 = vmatprep.subr.mxu0 0.0
      %684 = vmatpush1.msra.mxu0 %v478
      %685 = vmatprep.subr.mxu0 0.0
      %686 = vmatpush1.msra.mxu0 %v479
      %687 = vmatprep.subr.mxu0 0.0
      %688 = vmatpush1.msra.mxu0 %v480
      %689 = vmatprep.subr.mxu0 0.0
      %690 = vmatpush1.msra.mxu0 %v481
      %691 = vmatprep.subr.mxu0 0.0
      %692 = vmatpush1.msra.mxu0 %v482
      %693 = vmatprep.subr.mxu0 0.0
      %694 = vmatpush1.msra.mxu0 %v483
      %695 = vmatprep.subr.mxu0 0.0
      %696 = vmatpush1.msra.mxu0 %v484
      %697 = vmatprep.subr.mxu0 0.0
      %698 = vmatpush1.msra.mxu0 %v485
      %699 = vmatprep.subr.mxu0 0.0
      %700 = vmatpush1.msra.mxu0 %v486
      %701 = vmatprep.subr.mxu0 0.0
      %702 = vmatpush1.msra.mxu0 %v487
      %703 = vmatprep.subr.mxu0 0.0
      %704 = vmatpush1.msra.mxu0 %v488
      %705 = vmatprep.subr.mxu0 0.0
      %706 = vmatpush1.msra.mxu0 %v489
      %707 = vmatprep.subr.mxu0 0.0
      %708 = vmatpush1.msra.mxu0 %v490
      %709 = vmatprep.subr.mxu0 0.0
      %710 = vmatpush1.msra.mxu0 %v491
      %711 = vmatprep.subr.mxu0 0.0
      %712 = vmatpush1.msra.mxu0 %v492
      %713 = vmatprep.subr.mxu0 0.0
      %714 = vmatpush1.msra.mxu0 %v493
      %715 = vmatprep.subr.mxu0 0.0
      %716 = vmatpush1.msra.mxu0 %v494
      %717 = vmatprep.subr.mxu0 0.0
      %718 = vmatpush1.msra.mxu0 %v495
      %719 = vmatprep.subr.mxu0 0.0
      %720 = vmatpush1.msra.mxu0 %v496
      %721 = vmatprep.subr.mxu0 0.0
      %722 = vmatpush1.msra.mxu0 %v497
      %723 = vmatprep.subr.mxu0 0.0
      %724 = vmatpush1.msra.mxu0 %v498
      %725 = vmatprep.subr.mxu0 0.0
      %726 = vmatpush1.msra.mxu0 %v499
      %727 = vmatprep.subr.mxu0 0.0
      %728 = vmatpush1.msra.mxu0 %v500
      %729 = vmatprep.subr.mxu0 0.0
      %730 = vmatpush1.msra.mxu0 %v501
      %731 = vmatprep.subr.mxu0 0.0
      %732 = vmatpush1.msra.mxu0 %v502
      %733 = vmatprep.subr.mxu0 0.0
      %734 = vmatpush1.msra.mxu0 %v503
      %735 = vmatprep.subr.mxu0 0.0
      %736 = vmatpush1.msra.mxu0 %v504
      %737 = vmatprep.mubr.f32.mxu0 %v585
      %738 = vmatmul.mubr.f32.gmra.mrb[0].mxu0 %v553
      %v739 = vpop.f32.mrb[0].mxu0
      %v740 = vadd.f32 0.0, %v739
      %v741 = vpop.f32.mrb[0].mxu0
      %742 = vmatprep.mubr.f32.mxu0 %v586
      %743 = vmatmul.mubr.f32.gmra.mrb[0].mxu0 %v554
      %v744 = vpop.f32.mrb[0].mxu0
      %v745 = vadd.f32 0.0, %v744
      %v746 = vpop.f32.mrb[0].mxu0
      %747 = vdwg.mxu0
      %748 = vmatprep.subr.mxu0 0.0
      %749 = vmatpush1.msra.mxu0 %v505
      %750 = vmatprep.subr.mxu0 0.0
      %751 = vmatpush1.msra.mxu0 %v506
      %752 = vmatprep.subr.mxu0 0.0
      %753 = vmatpush1.msra.mxu0 %v507
      %754 = vmatprep.subr.mxu0 0.0
      %755 = vmatpush1.msra.mxu0 %v508
      %756 = vmatprep.subr.mxu0 0.0
      %757 = vmatpush1.msra.mxu0 %v509
      %758 = vmatprep.subr.mxu0 0.0
      %759 = vmatpush1.msra.mxu0 %v510
      %760 = vmatprep.subr.mxu0 0.0
      %761 = vmatpush1.msra.mxu0 %v511
      %762 = vmatprep.subr.mxu0 0.0
      %763 = vmatpush1.msra.mxu0 %v512
      %764 = vmatprep.subr.mxu0 0.0
      %765 = vmatpush1.msra.mxu0 %v513
      %766 = vmatprep.subr.mxu0 0.0
      %767 = vmatpush1.msra.mxu0 %v514
      %768 = vmatprep.subr.mxu0 0.0
      %769 = vmatpush1.msra.mxu0 %v515
      %770 = vmatprep.subr.mxu0 0.0
      %771 = vmatpush1.msra.mxu0 %v516
      %772 = vmatprep.subr.mxu0 0.0
      %773 = vmatpush1.msra.mxu0 %v517
      %774 = vmatprep.subr.mxu0 0.0
      %775 = vmatpush1.msra.mxu0 %v518
      %776 = vmatprep.subr.mxu0 0.0
      %777 = vmatpush1.msra.mxu0 %v519
      %778 = vmatprep.subr.mxu0 0.0
      %779 = vmatpush1.msra.mxu0 %v520
      %780 = vmatprep.subr.mxu0 0.0
      %781 = vmatpush1.msra.mxu0 %v521
      %782 = vmatprep.subr.mxu0 0.0
      %783 = vmatpush1.msra.mxu0 %v522
      %784 = vmatprep.subr.mxu0 0.0
      %785 = vmatpush1.msra.mxu0 %v523
      %786 = vmatprep.subr.mxu0 0.0
      %787 = vmatpush1.msra.mxu0 %v524
      %788 = vmatprep.subr.mxu0 0.0
      %789 = vmatpush1.msra.mxu0 %v525
      %790 = vmatprep.subr.mxu0 0.0
      %791 = vmatpush1.msra.mxu0 %v526
      %792 = vmatprep.subr.mxu0 0.0
      %793 = vmatpush1.msra.mxu0 %v527
      %794 = vmatprep.subr.mxu0 0.0
      %795 = vmatpush1.msra.mxu0 %v528
      %796 = vmatprep.subr.mxu0 0.0
      %797 = vmatpush1.msra.mxu0 %v529
      %798 = vmatprep.subr.mxu0 0.0
      %799 = vmatpush1.msra.mxu0 %v530
      %800 = vmatprep.subr.mxu0 0.0
      %801 = vmatpush1.msra.mxu0 %v531
      %802 = vmatprep.subr.mxu0 0.0
      %803 = vmatpush1.msra.mxu0 %v532
      %804 = vmatprep.subr.mxu0 0.0
      %805 = vmatpush1.msra.mxu0 %v533
      %806 = vmatprep.subr.mxu0 0.0
      %807 = vmatpush1.msra.mxu0 %v534
      %808 = vmatprep.subr.mxu0 0.0
      %809 = vmatpush1.msra.mxu0 %v535
      %810 = vmatprep.subr.mxu0 0.0
      %811 = vmatpush1.msra.mxu0 %v536
      %812 = vmatprep.mubr.f32.mxu0 %v649
      %813 = vmatmul.mubr.f32.gmra.mrb[0].mxu0 %v617
      %v814 = vpop.f32.mrb[0].mxu0
      %v815 = vadd.f32 %v740, %v814
      %v816 = vpop.f32.mrb[0].mxu0
      %817 = vmatprep.mubr.f32.mxu0 %v650
      %818 = vmatmul.mubr.f32.gmra.mrb[0].mxu0 %v618
      %v819 = vpop.f32.mrb[0].mxu0
      %v820 = vadd.f32 %v745, %v819
      %v821 = vpop.f32.mrb[0].mxu0
      %822 = vdwg.mxu0
      %v823 = vsub.f32 %v815, 0.0
      %v824 = vrsqrt.pop %v823
      %vm825 = vcmp.ge.s32.totalorder %v16, 0
      %827 = vset.pattern.permute.xlu0 0
      %828 = vperm.xlu0 %827, %v824
      %v829 = vpop.permute.xlu0 %828
      %v831 = vmul.f32 %v823, %v829
      %v832 = vsel %vm825, %v831, 0.0
      %vm833 = vcmp.eq.s32.totalorder %v22, 0
      %vm834 = vcmp.eq.s32.totalorder %v23, 0
      %v835 = vsel %vm833, 1, 0
      %v836 = vsel %vm834, 1, 0
      %v837 = vcvt.s32.f32 %v835
      %v838 = vcvt.s32.f32 %v836
      %v839 = vlaneseq
      %v840 = vshrl.u32 %v839, 7
      %v841 = vsub.s32 0, %v840
      %v842 = vrot.slane %v832, %v841
      %v843 = vmul.f32 %v842, %v837
      %v844 = vmul.f32 %v842, %v838
      %v845 = vadd.f32 %v843, 0.0
      %v846 = vadd.f32 %v844, 0.0
      %848 = vset.pattern.permute.xlu0 1
      %849 = vperm.xlu0 %848, %v845
      %v850 = vpop.permute.xlu0 %849
      %853 = vset.pattern.permute.xlu0 1
      %854 = vperm.xlu0 %853, %v846
      %v855 = vpop.permute.xlu0 %854
      %v857 = vmul.f32 %v845, %v850
      %v858 = vmul.f32 %v846, %v855
      %vm859 = vcmask 130048
      %v860 = vsel %vm859, %v857, 0.0
      %v861 = vsel %vm859, %v858, 0.0
      %v862 = vadd.f32 %v860, %v861
      %v863 = vrot.slane %v862, 4
      %v864 = vadd.f32 %v862, %v863
      %v865 = vrot.slane %v864, 2
      %v866 = vadd.f32 %v864, %v865
      %v867 = vrot.slane %v866, 1
      %v868 = vadd.f32 %v866, %v867
      %v869 = vsub.f32 %v815, %v868
      %v870 = vrsqrt.pop %v869
      %vm871 = vcmp.ge.s32.totalorder %v16, 1
      %873 = vset.pattern.permute.xlu0 1
      %874 = vperm.xlu0 %873, %v870
      %v875 = vpop.permute.xlu0 %874
      %v877 = vmul.f32 %v869, %v875
      %v878 = vsel %vm871, %v877, 0.0
      %vm879 = vcmp.eq.s32.totalorder %v22, 1
      %vm880 = vcmp.eq.s32.totalorder %v23, 1
      %v881 = vsel %vm879, 1, 0
      %v882 = vsel %vm880, 1, 0
      %v883 = vcvt.s32.f32 %v881
      %v884 = vcvt.s32.f32 %v882
      %v885 = vlaneseq
      %v886 = vshrl.u32 %v885, 7
      %v887 = vsub.s32 1, %v886
      %v888 = vrot.slane %v878, %v887
      %v889 = vmul.f32 %v888, %v883
      %v890 = vmul.f32 %v888, %v884
      %v891 = vadd.f32 %v845, %v889
      %v892 = vadd.f32 %v846, %v890
      %894 = vset.pattern.permute.xlu0 2
      %895 = vperm.xlu0 %894, %v891
      %v896 = vpop.permute.xlu0 %895
      %899 = vset.pattern.permute.xlu0 2
      %900 = vperm.xlu0 %899, %v892
      %v901 = vpop.permute.xlu0 %900
      %v903 = vmul.f32 %v891, %v896
      %v904 = vmul.f32 %v892, %v901
      %v905 = vsel %vm859, %v903, 0.0
      %v906 = vsel %vm859, %v904, 0.0
      %v907 = vadd.f32 %v905, %v906
      %v908 = vrot.slane %v907, 4
      %v909 = vadd.f32 %v907, %v908
      %v910 = vrot.slane %v909, 2
      %v911 = vadd.f32 %v909, %v910
      %v912 = vrot.slane %v911, 1
      %v913 = vadd.f32 %v911, %v912
      %v914 = vsub.f32 %v815, %v913
      %v915 = vrsqrt.pop %v914
      %vm916 = vcmp.ge.s32.totalorder %v16, 2
      %918 = vset.pattern.permute.xlu0 2
      %919 = vperm.xlu0 %918, %v915
      %v920 = vpop.permute.xlu0 %919
      %v922 = vmul.f32 %v914, %v920
      %v923 = vsel %vm916, %v922, 0.0
      %vm924 = vcmp.eq.s32.totalorder %v22, 2
      %vm925 = vcmp.eq.s32.totalorder %v23, 2
      %v926 = vsel %vm924, 1, 0
      %v927 = vsel %vm925, 1, 0
      %v928 = vcvt.s32.f32 %v926
      %v929 = vcvt.s32.f32 %v927
      %v930 = vlaneseq
      %v931 = vshrl.u32 %v930, 7
      %v932 = vsub.s32 2, %v931
      %v933 = vrot.slane %v923, %v932
      %v934 = vmul.f32 %v933, %v928
      %v935 = vmul.f32 %v933, %v929
      %v936 = vadd.f32 %v891, %v934
      %v937 = vadd.f32 %v892, %v935
      %939 = vset.pattern.permute.xlu0 3
      %940 = vperm.xlu0 %939, %v936
      %v941 = vpop.permute.xlu0 %940
      %944 = vset.pattern.permute.xlu0 3
      %945 = vperm.xlu0 %944, %v937
      %v946 = vpop.permute.xlu0 %945
      %v948 = vmul.f32 %v936, %v941
      %v949 = vmul.f32 %v937, %v946
      %v950 = vsel %vm859, %v948, 0.0
      %v951 = vsel %vm859, %v949, 0.0
      %v952 = vadd.f32 %v950, %v951
      %v953 = vrot.slane %v952, 4
      %v954 = vadd.f32 %v952, %v953
      %v955 = vrot.slane %v954, 2
      %v956 = vadd.f32 %v954, %v955
      %v957 = vrot.slane %v956, 1
      %v958 = vadd.f32 %v956, %v957
      %v959 = vsub.f32 %v815, %v958
      %v960 = vrsqrt.pop %v959
      %vm961 = vcmp.ge.s32.totalorder %v16, 3
      %963 = vset.pattern.permute.xlu0 3
      %964 = vperm.xlu0 %963, %v960
      %v965 = vpop.permute.xlu0 %964
      %v967 = vmul.f32 %v959, %v965
      %v968 = vsel %vm961, %v967, 0.0
      %vm969 = vcmp.eq.s32.totalorder %v22, 3
      %vm970 = vcmp.eq.s32.totalorder %v23, 3
      %v971 = vsel %vm969, 1, 0
      %v972 = vsel %vm970, 1, 0
      %v973 = vcvt.s32.f32 %v971
      %v974 = vcvt.s32.f32 %v972
      %v975 = vlaneseq
      %v976 = vshrl.u32 %v975, 7
      %v977 = vsub.s32 3, %v976
      %v978 = vrot.slane %v968, %v977
      %v979 = vmul.f32 %v978, %v973
      %v980 = vmul.f32 %v978, %v974
      %v981 = vadd.f32 %v936, %v979
      %v982 = vadd.f32 %v937, %v980
      %984 = vset.pattern.permute.xlu0 4
      %985 = vperm.xlu0 %984, %v981
      %v986 = vpop.permute.xlu0 %985
      %989 = vset.pattern.permute.xlu0 4
      %990 = vperm.xlu0 %989, %v982
      %v991 = vpop.permute.xlu0 %990
      %v993 = vmul.f32 %v981, %v986
      %v994 = vmul.f32 %v982, %v991
      %v995 = vsel %vm859, %v993, 0.0
      %v996 = vsel %vm859, %v994, 0.0
      %v997 = vadd.f32 %v995, %v996
      %v998 = vrot.slane %v997, 4
      %v999 = vadd.f32 %v997, %v998
      %v1000 = vrot.slane %v999, 2
      %v1001 = vadd.f32 %v999, %v1000
      %v1002 = vrot.slane %v1001, 1
      %v1003 = vadd.f32 %v1001, %v1002
      %v1004 = vsub.f32 %v815, %v1003
      %v1005 = vrsqrt.pop %v1004
      %vm1006 = vcmp.ge.s32.totalorder %v16, 4
      %1008 = vset.pattern.permute.xlu0 4
      %1009 = vperm.xlu0 %1008, %v1005
      %v1010 = vpop.permute.xlu0 %1009
      %v1012 = vmul.f32 %v1004, %v1010
      %v1013 = vsel %vm1006, %v1012, 0.0
      %vm1014 = vcmp.eq.s32.totalorder %v22, 4
      %vm1015 = vcmp.eq.s32.totalorder %v23, 4
      %v1016 = vsel %vm1014, 1, 0
      %v1017 = vsel %vm1015, 1, 0
      %v1018 = vcvt.s32.f32 %v1016
      %v1019 = vcvt.s32.f32 %v1017
      %v1020 = vlaneseq
      %v1021 = vshrl.u32 %v1020, 7
      %v1022 = vsub.s32 4, %v1021
      %v1023 = vrot.slane %v1013, %v1022
      %v1024 = vmul.f32 %v1023, %v1018
      %v1025 = vmul.f32 %v1023, %v1019
      %v1026 = vadd.f32 %v981, %v1024
      %v1027 = vadd.f32 %v982, %v1025
      %1029 = vset.pattern.permute.xlu0 5
      %1030 = vperm.xlu0 %1029, %v1026
      %v1031 = vpop.permute.xlu0 %1030
      %1034 = vset.pattern.permute.xlu0 5
      %1035 = vperm.xlu0 %1034, %v1027
      %v1036 = vpop.permute.xlu0 %1035
      %v1038 = vmul.f32 %v1026, %v1031
      %v1039 = vmul.f32 %v1027, %v1036
      %v1040 = vsel %vm859, %v1038, 0.0
      %v1041 = vsel %vm859, %v1039, 0.0
      %v1042 = vadd.f32 %v1040, %v1041
      %v1043 = vrot.slane %v1042, 4
      %v1044 = vadd.f32 %v1042, %v1043
      %v1045 = vrot.slane %v1044, 2
      %v1046 = vadd.f32 %v1044, %v1045
      %v1047 = vrot.slane %v1046, 1
      %v1048 = vadd.f32 %v1046, %v1047
      %v1049 = vsub.f32 %v815, %v1048
      %v1050 = vrsqrt.pop %v1049
      %vm1051 = vcmp.ge.s32.totalorder %v16, 5
      %1053 = vset.pattern.permute.xlu0 5
      %1054 = vperm.xlu0 %1053, %v1050
      %v1055 = vpop.permute.xlu0 %1054
      %v1057 = vmul.f32 %v1049, %v1055
      %v1058 = vsel %vm1051, %v1057, 0.0
      %vm1059 = vcmp.eq.s32.totalorder %v22, 5
      %vm1060 = vcmp.eq.s32.totalorder %v23, 5
      %v1061 = vsel %vm1059, 1, 0
      %v1062 = vsel %vm1060, 1, 0
      %v1063 = vcvt.s32.f32 %v1061
      %v1064 = vcvt.s32.f32 %v1062
      %v1065 = vlaneseq
      %v1066 = vshrl.u32 %v1065, 7
      %v1067 = vsub.s32 5, %v1066
      %v1068 = vrot.slane %v1058, %v1067
      %v1069 = vmul.f32 %v1068, %v1063
      %v1070 = vmul.f32 %v1068, %v1064
      %v1071 = vadd.f32 %v1026, %v1069
      %v1072 = vadd.f32 %v1027, %v1070
      %1074 = vset.pattern.permute.xlu0 6
      %1075 = vperm.xlu0 %1074, %v1071
      %v1076 = vpop.permute.xlu0 %1075
      %1079 = vset.pattern.permute.xlu0 6
      %1080 = vperm.xlu0 %1079, %v1072
      %v1081 = vpop.permute.xlu0 %1080
      %v1083 = vmul.f32 %v1071, %v1076
      %v1084 = vmul.f32 %v1072, %v1081
      %v1085 = vsel %vm859, %v1083, 0.0
      %v1086 = vsel %vm859, %v1084, 0.0
      %v1087 = vadd.f32 %v1085, %v1086
      %v1088 = vrot.slane %v1087, 4
      %v1089 = vadd.f32 %v1087, %v1088
      %v1090 = vrot.slane %v1089, 2
      %v1091 = vadd.f32 %v1089, %v1090
      %v1092 = vrot.slane %v1091, 1
      %v1093 = vadd.f32 %v1091, %v1092
      %v1094 = vsub.f32 %v815, %v1093
      %v1095 = vrsqrt.pop %v1094
      %vm1096 = vcmp.ge.s32.totalorder %v16, 6
      %1098 = vset.pattern.permute.xlu0 6
      %1099 = vperm.xlu0 %1098, %v1095
      %v1100 = vpop.permute.xlu0 %1099
      %v1102 = vmul.f32 %v1094, %v1100
      %v1103 = vsel %vm1096, %v1102, 0.0
      %vm1104 = vcmp.eq.s32.totalorder %v22, 6
      %vm1105 = vcmp.eq.s32.totalorder %v23, 6
      %v1106 = vsel %vm1104, 1, 0
      %v1107 = vsel %vm1105, 1, 0
      %v1108 = vcvt.s32.f32 %v1106
      %v1109 = vcvt.s32.f32 %v1107
      %v1110 = vlaneseq
      %v1111 = vshrl.u32 %v1110, 7
      %v1112 = vsub.s32 6, %v1111
      %v1113 = vrot.slane %v1103, %v1112
      %v1114 = vmul.f32 %v1113, %v1108
      %v1115 = vmul.f32 %v1113, %v1109
      %v1116 = vadd.f32 %v1071, %v1114
      %v1117 = vadd.f32 %v1072, %v1115
      %1119 = vset.pattern.permute.xlu0 7
      %1120 = vperm.xlu0 %1119, %v1116
      %v1121 = vpop.permute.xlu0 %1120
      %1124 = vset.pattern.permute.xlu0 7
      %1125 = vperm.xlu0 %1124, %v1117
      %v1126 = vpop.permute.xlu0 %1125
      %v1128 = vmul.f32 %v1116, %v1121
      %v1129 = vmul.f32 %v1117, %v1126
      %v1130 = vsel %vm859, %v1128, 0.0
      %v1131 = vsel %vm859, %v1129, 0.0
      %v1132 = vadd.f32 %v1130, %v1131
      %v1133 = vrot.slane %v1132, 4
      %v1134 = vadd.f32 %v1132, %v1133
      %v1135 = vrot.slane %v1134, 2
      %v1136 = vadd.f32 %v1134, %v1135
      %v1137 = vrot.slane %v1136, 1
      %v1138 = vadd.f32 %v1136, %v1137
      %v1139 = vsub.f32 %v815, %v1138
      %v1140 = vrsqrt.pop %v1139
      %vm1141 = vcmp.ge.s32.totalorder %v16, 7
      %1143 = vset.pattern.permute.xlu0 7
      %1144 = vperm.xlu0 %1143, %v1140
      %v1145 = vpop.permute.xlu0 %1144
      %v1147 = vmul.f32 %v1139, %v1145
      %v1148 = vsel %vm1141, %v1147, 0.0
      %vm1149 = vcmp.eq.s32.totalorder %v22, 7
      %vm1150 = vcmp.eq.s32.totalorder %v23, 7
      %v1151 = vsel %vm1149, 1, 0
      %v1152 = vsel %vm1150, 1, 0
      %v1153 = vcvt.s32.f32 %v1151
      %v1154 = vcvt.s32.f32 %v1152
      %v1155 = vlaneseq
      %v1156 = vshrl.u32 %v1155, 7
      %v1157 = vsub.s32 7, %v1156
      %v1158 = vrot.slane %v1148, %v1157
      %v1159 = vmul.f32 %v1158, %v1153
      %v1160 = vmul.f32 %v1158, %v1154
      %v1161 = vadd.f32 %v1116, %v1159
      %v1162 = vadd.f32 %v1117, %v1160
      %1164 = vset.pattern.permute.xlu0 8
      %1165 = vperm.xlu0 %1164, %v1161
      %v1166 = vpop.permute.xlu0 %1165
      %1169 = vset.pattern.permute.xlu0 8
      %1170 = vperm.xlu0 %1169, %v1162
      %v1171 = vpop.permute.xlu0 %1170
      %v1173 = vmul.f32 %v1161, %v1166
      %v1174 = vmul.f32 %v1162, %v1171
      %v1175 = vsel %vm859, %v1173, 0.0
      %v1176 = vsel %vm859, %v1174, 0.0
      %v1177 = vadd.f32 %v1175, %v1176
      %v1178 = vrot.slane %v1177, 4
      %v1179 = vadd.f32 %v1177, %v1178
      %v1180 = vrot.slane %v1179, 2
      %v1181 = vadd.f32 %v1179, %v1180
      %v1182 = vrot.slane %v1181, 1
      %v1183 = vadd.f32 %v1181, %v1182
      %v1184 = vsub.f32 %v820, %v1183
      %v1185 = vrsqrt.pop %v1184
      %vm1186 = vcmp.ge.s32.totalorder %v16, 8
      %1188 = vset.pattern.permute.xlu0 8
      %1189 = vperm.xlu0 %1188, %v1185
      %v1190 = vpop.permute.xlu0 %1189
      %v1192 = vmul.f32 %v1184, %v1190
      %v1193 = vsel %vm1186, %v1192, 0.0
      %vm1194 = vcmp.eq.s32.totalorder %v22, 8
      %vm1195 = vcmp.eq.s32.totalorder %v23, 8
      %v1196 = vsel %vm1194, 1, 0
      %v1197 = vsel %vm1195, 1, 0
      %v1198 = vcvt.s32.f32 %v1196
      %v1199 = vcvt.s32.f32 %v1197
      %v1200 = vlaneseq
      %v1201 = vshrl.u32 %v1200, 7
      %v1202 = vsub.s32 0, %v1201
      %v1203 = vrot.slane %v1193, %v1202
      %v1204 = vmul.f32 %v1203, %v1198
      %v1205 = vmul.f32 %v1203, %v1199
      %v1206 = vadd.f32 %v1161, %v1204
      %v1207 = vadd.f32 %v1162, %v1205
      %1209 = vset.pattern.permute.xlu0 9
      %1210 = vperm.xlu0 %1209, %v1206
      %v1211 = vpop.permute.xlu0 %1210
      %1214 = vset.pattern.permute.xlu0 9
      %1215 = vperm.xlu0 %1214, %v1207
      %v1216 = vpop.permute.xlu0 %1215
      %v1218 = vmul.f32 %v1206, %v1211
      %v1219 = vmul.f32 %v1207, %v1216
      %v1220 = vsel %vm859, %v1218, 0.0
      %v1221 = vsel %vm859, %v1219, 0.0
      %v1222 = vadd.f32 %v1220, %v1221
      %v1223 = vrot.slane %v1222, 4
      %v1224 = vadd.f32 %v1222, %v1223
      %v1225 = vrot.slane %v1224, 2
      %v1226 = vadd.f32 %v1224, %v1225
      %v1227 = vrot.slane %v1226, 1
      %v1228 = vadd.f32 %v1226, %v1227
      %v1229 = vsub.f32 %v820, %v1228
      %v1230 = vrsqrt.pop %v1229
      %vm1231 = vcmp.ge.s32.totalorder %v16, 9
      %1233 = vset.pattern.permute.xlu0 9
      %1234 = vperm.xlu0 %1233, %v1230
      %v1235 = vpop.permute.xlu0 %1234
      %v1237 = vmul.f32 %v1229, %v1235
      %v1238 = vsel %vm1231, %v1237, 0.0
      %vm1239 = vcmp.eq.s32.totalorder %v22, 9
      %vm1240 = vcmp.eq.s32.totalorder %v23, 9
      %v1241 = vsel %vm1239, 1, 0
      %v1242 = vsel %vm1240, 1, 0
      %v1243 = vcvt.s32.f32 %v1241
      %v1244 = vcvt.s32.f32 %v1242
      %v1245 = vlaneseq
      %v1246 = vshrl.u32 %v1245, 7
      %v1247 = vsub.s32 1, %v1246
      %v1248 = vrot.slane %v1238, %v1247
      %v1249 = vmul.f32 %v1248, %v1243
      %v1250 = vmul.f32 %v1248, %v1244
      %v1251 = vadd.f32 %v1206, %v1249
      %v1252 = vadd.f32 %v1207, %v1250
      %1254 = vset.pattern.permute.xlu0 10
      %1255 = vperm.xlu0 %1254, %v1251
      %v1256 = vpop.permute.xlu0 %1255
      %1259 = vset.pattern.permute.xlu0 10
      %1260 = vperm.xlu0 %1259, %v1252
      %v1261 = vpop.permute.xlu0 %1260
      %v1263 = vmul.f32 %v1251, %v1256
      %v1264 = vmul.f32 %v1252, %v1261
      %v1265 = vsel %vm859, %v1263, 0.0
      %v1266 = vsel %vm859, %v1264, 0.0
      %v1267 = vadd.f32 %v1265, %v1266
      %v1268 = vrot.slane %v1267, 4
      %v1269 = vadd.f32 %v1267, %v1268
      %v1270 = vrot.slane %v1269, 2
      %v1271 = vadd.f32 %v1269, %v1270
      %v1272 = vrot.slane %v1271, 1
      %v1273 = vadd.f32 %v1271, %v1272
      %v1274 = vsub.f32 %v820, %v1273
      %v1275 = vrsqrt.pop %v1274
      %vm1276 = vcmp.ge.s32.totalorder %v16, 10
      %1278 = vset.pattern.permute.xlu0 10
      %1279 = vperm.xlu0 %1278, %v1275
      %v1280 = vpop.permute.xlu0 %1279
      %v1282 = vmul.f32 %v1274, %v1280
      %v1283 = vsel %vm1276, %v1282, 0.0
      %vm1284 = vcmp.eq.s32.totalorder %v22, 10
      %vm1285 = vcmp.eq.s32.totalorder %v23, 10
      %v1286 = vsel %vm1284, 1, 0
      %v1287 = vsel %vm1285, 1, 0
      %v1288 = vcvt.s32.f32 %v1286
      %v1289 = vcvt.s32.f32 %v1287
      %v1290 = vlaneseq
      %v1291 = vshrl.u32 %v1290, 7
      %v1292 = vsub.s32 2, %v1291
      %v1293 = vrot.slane %v1283, %v1292
      %v1294 = vmul.f32 %v1293, %v1288
      %v1295 = vmul.f32 %v1293, %v1289
      %v1296 = vadd.f32 %v1251, %v1294
      %v1297 = vadd.f32 %v1252, %v1295
      %1299 = vset.pattern.permute.xlu0 11
      %1300 = vperm.xlu0 %1299, %v1296
      %v1301 = vpop.permute.xlu0 %1300
      %1304 = vset.pattern.permute.xlu0 11
      %1305 = vperm.xlu0 %1304, %v1297
      %v1306 = vpop.permute.xlu0 %1305
      %v1308 = vmul.f32 %v1296, %v1301
      %v1309 = vmul.f32 %v1297, %v1306
      %v1310 = vsel %vm859, %v1308, 0.0
      %v1311 = vsel %vm859, %v1309, 0.0
      %v1312 = vadd.f32 %v1310, %v1311
      %v1313 = vrot.slane %v1312, 4
      %v1314 = vadd.f32 %v1312, %v1313
      %v1315 = vrot.slane %v1314, 2
      %v1316 = vadd.f32 %v1314, %v1315
      %v1317 = vrot.slane %v1316, 1
      %v1318 = vadd.f32 %v1316, %v1317
      %v1319 = vsub.f32 %v820, %v1318
      %v1320 = vrsqrt.pop %v1319
      %vm1321 = vcmp.ge.s32.totalorder %v16, 11
      %1323 = vset.pattern.permute.xlu0 11
      %1324 = vperm.xlu0 %1323, %v1320
      %v1325 = vpop.permute.xlu0 %1324
      %v1327 = vmul.f32 %v1319, %v1325
      %v1328 = vsel %vm1321, %v1327, 0.0
      %vm1329 = vcmp.eq.s32.totalorder %v22, 11
      %vm1330 = vcmp.eq.s32.totalorder %v23, 11
      %v1331 = vsel %vm1329, 1, 0
      %v1332 = vsel %vm1330, 1, 0
      %v1333 = vcvt.s32.f32 %v1331
      %v1334 = vcvt.s32.f32 %v1332
      %v1335 = vlaneseq
      %v1336 = vshrl.u32 %v1335, 7
      %v1337 = vsub.s32 3, %v1336
      %v1338 = vrot.slane %v1328, %v1337
      %v1339 = vmul.f32 %v1338, %v1333
      %v1340 = vmul.f32 %v1338, %v1334
      %v1341 = vadd.f32 %v1296, %v1339
      %v1342 = vadd.f32 %v1297, %v1340
      %1344 = vset.pattern.permute.xlu0 12
      %1345 = vperm.xlu0 %1344, %v1341
      %v1346 = vpop.permute.xlu0 %1345
      %1349 = vset.pattern.permute.xlu0 12
      %1350 = vperm.xlu0 %1349, %v1342
      %v1351 = vpop.permute.xlu0 %1350
      %v1353 = vmul.f32 %v1341, %v1346
      %v1354 = vmul.f32 %v1342, %v1351
      %v1355 = vsel %vm859, %v1353, 0.0
      %v1356 = vsel %vm859, %v1354, 0.0
      %v1357 = vadd.f32 %v1355, %v1356
      %v1358 = vrot.slane %v1357, 4
      %v1359 = vadd.f32 %v1357, %v1358
      %v1360 = vrot.slane %v1359, 2
      %v1361 = vadd.f32 %v1359, %v1360
      %v1362 = vrot.slane %v1361, 1
      %v1363 = vadd.f32 %v1361, %v1362
      %v1364 = vsub.f32 %v820, %v1363
      %v1365 = vrsqrt.pop %v1364
      %vm1366 = vcmp.ge.s32.totalorder %v16, 12
      %1368 = vset.pattern.permute.xlu0 12
      %1369 = vperm.xlu0 %1368, %v1365
      %v1370 = vpop.permute.xlu0 %1369
      %v1372 = vmul.f32 %v1364, %v1370
      %v1373 = vsel %vm1366, %v1372, 0.0
      %vm1374 = vcmp.eq.s32.totalorder %v22, 12
      %vm1375 = vcmp.eq.s32.totalorder %v23, 12
      %v1376 = vsel %vm1374, 1, 0
      %v1377 = vsel %vm1375, 1, 0
      %v1378 = vcvt.s32.f32 %v1376
      %v1379 = vcvt.s32.f32 %v1377
      %v1380 = vlaneseq
      %v1381 = vshrl.u32 %v1380, 7
      %v1382 = vsub.s32 4, %v1381
      %v1383 = vrot.slane %v1373, %v1382
      %v1384 = vmul.f32 %v1383, %v1378
      %v1385 = vmul.f32 %v1383, %v1379
      %v1386 = vadd.f32 %v1341, %v1384
      %v1387 = vadd.f32 %v1342, %v1385
      %1389 = vset.pattern.permute.xlu0 13
      %1390 = vperm.xlu0 %1389, %v1386
      %v1391 = vpop.permute.xlu0 %1390
      %1394 = vset.pattern.permute.xlu0 13
      %1395 = vperm.xlu0 %1394, %v1387
      %v1396 = vpop.permute.xlu0 %1395
      %v1398 = vmul.f32 %v1386, %v1391
      %v1399 = vmul.f32 %v1387, %v1396
      %v1400 = vsel %vm859, %v1398, 0.0
      %v1401 = vsel %vm859, %v1399, 0.0
      %v1402 = vadd.f32 %v1400, %v1401
      %v1403 = vrot.slane %v1402, 4
      %v1404 = vadd.f32 %v1402, %v1403
      %v1405 = vrot.slane %v1404, 2
      %v1406 = vadd.f32 %v1404, %v1405
      %v1407 = vrot.slane %v1406, 1
      %v1408 = vadd.f32 %v1406, %v1407
      %v1409 = vsub.f32 %v820, %v1408
      %v1410 = vrsqrt.pop %v1409
      %vm1411 = vcmp.ge.s32.totalorder %v16, 13
      %1413 = vset.pattern.permute.xlu0 13
      %1414 = vperm.xlu0 %1413, %v1410
      %v1415 = vpop.permute.xlu0 %1414
      %v1417 = vmul.f32 %v1409, %v1415
      %v1418 = vsel %vm1411, %v1417, 0.0
      %vm1419 = vcmp.eq.s32.totalorder %v22, 13
      %vm1420 = vcmp.eq.s32.totalorder %v23, 13
      %v1421 = vsel %vm1419, 1, 0
      %v1422 = vsel %vm1420, 1, 0
      %v1423 = vcvt.s32.f32 %v1421
      %v1424 = vcvt.s32.f32 %v1422
      %v1425 = vlaneseq
      %v1426 = vshrl.u32 %v1425, 7
      %v1427 = vsub.s32 5, %v1426
      %v1428 = vrot.slane %v1418, %v1427
      %v1429 = vmul.f32 %v1428, %v1423
      %v1430 = vmul.f32 %v1428, %v1424
      %v1431 = vadd.f32 %v1386, %v1429
      %v1432 = vadd.f32 %v1387, %v1430
      %1434 = vset.pattern.permute.xlu0 14
      %1435 = vperm.xlu0 %1434, %v1431
      %v1436 = vpop.permute.xlu0 %1435
      %1439 = vset.pattern.permute.xlu0 14
      %1440 = vperm.xlu0 %1439, %v1432
      %v1441 = vpop.permute.xlu0 %1440
      %v1443 = vmul.f32 %v1431, %v1436
      %v1444 = vmul.f32 %v1432, %v1441
      %v1445 = vsel %vm859, %v1443, 0.0
      %v1446 = vsel %vm859, %v1444, 0.0
      %v1447 = vadd.f32 %v1445, %v1446
      %v1448 = vrot.slane %v1447, 4
      %v1449 = vadd.f32 %v1447, %v1448
      %v1450 = vrot.slane %v1449, 2
      %v1451 = vadd.f32 %v1449, %v1450
      %v1452 = vrot.slane %v1451, 1
      %v1453 = vadd.f32 %v1451, %v1452
      %v1454 = vsub.f32 %v820, %v1453
      %v1455 = vrsqrt.pop %v1454
      %vm1456 = vcmp.ge.s32.totalorder %v16, 14
      %1458 = vset.pattern.permute.xlu0 14
      %1459 = vperm.xlu0 %1458, %v1455
      %v1460 = vpop.permute.xlu0 %1459
      %v1462 = vmul.f32 %v1454, %v1460
      %v1463 = vsel %vm1456, %v1462, 0.0
      %vm1464 = vcmp.eq.s32.totalorder %v22, 14
      %vm1465 = vcmp.eq.s32.totalorder %v23, 14
      %v1466 = vsel %vm1464, 1, 0
      %v1467 = vsel %vm1465, 1, 0
      %v1468 = vcvt.s32.f32 %v1466
      %v1469 = vcvt.s32.f32 %v1467
      %v1470 = vlaneseq
      %v1471 = vshrl.u32 %v1470, 7
      %v1472 = vsub.s32 6, %v1471
      %v1473 = vrot.slane %v1463, %v1472
      %v1474 = vmul.f32 %v1473, %v1468
      %v1475 = vmul.f32 %v1473, %v1469
      %v1476 = vadd.f32 %v1431, %v1474
      %v1477 = vadd.f32 %v1432, %v1475
      %1479 = vset.pattern.permute.xlu0 15
      %1480 = vperm.xlu0 %1479, %v1476
      %v1481 = vpop.permute.xlu0 %1480
      %1484 = vset.pattern.permute.xlu0 15
      %1485 = vperm.xlu0 %1484, %v1477
      %v1486 = vpop.permute.xlu0 %1485
      %v1488 = vmul.f32 %v1476, %v1481
      %v1489 = vmul.f32 %v1477, %v1486
      %v1490 = vsel %vm859, %v1488, 0.0
      %v1491 = vsel %vm859, %v1489, 0.0
      %v1492 = vadd.f32 %v1490, %v1491
      %v1493 = vrot.slane %v1492, 4
      %v1494 = vadd.f32 %v1492, %v1493
      %v1495 = vrot.slane %v1494, 2
      %v1496 = vadd.f32 %v1494, %v1495
      %v1497 = vrot.slane %v1496, 1
      %v1498 = vadd.f32 %v1496, %v1497
      %v1499 = vsub.f32 %v820, %v1498
      %v1500 = vrsqrt.pop %v1499
      %vm1501 = vcmp.ge.s32.totalorder %v16, 15
      %1503 = vset.pattern.permute.xlu0 15
      %1504 = vperm.xlu0 %1503, %v1500
      %v1505 = vpop.permute.xlu0 %1504
      %v1507 = vmul.f32 %v1499, %v1505
      %v1508 = vsel %vm1501, %v1507, 0.0
      %vm1509 = vcmp.eq.s32.totalorder %v22, 15
      %vm1510 = vcmp.eq.s32.totalorder %v23, 15
      %v1511 = vsel %vm1509, 1, 0
      %v1512 = vsel %vm1510, 1, 0
      %v1513 = vcvt.s32.f32 %v1511
      %v1514 = vcvt.s32.f32 %v1512
      %v1515 = vlaneseq
      %v1516 = vshrl.u32 %v1515, 7
      %v1517 = vsub.s32 7, %v1516
      %v1518 = vrot.slane %v1508, %v1517
      %v1519 = vmul.f32 %v1518, %v1513
      %v1520 = vmul.f32 %v1518, %v1514
      %v1521 = vadd.f32 %v1476, %v1519
      %v1522 = vadd.f32 %v1477, %v1520
      %1523 = vst.msk [vmem:[#allocation3] sm:$0xff] %vm859, %v1521
      %1524 = vst.msk [vmem:[#allocation3 + $0x8] sm:$0xff] %vm859, %v1522
      %v1525 = vrot.slane %v870, 1
      %v1527 = vrot.slane %v915, 2
      %v1529 = vrot.slane %v960, 3
      %v1531 = vrot.slane %v1005, 4
      %v1533 = vrot.slane %v1050, 5
      %v1535 = vrot.slane %v1095, 6
      %v1537 = vrot.slane %v1140, 7
      %v1539 = vrot.slane %v1230, 1
      %v1541 = vrot.slane %v1275, 2
      %v1543 = vrot.slane %v1320, 3
      %v1545 = vrot.slane %v1365, 4
      %v1547 = vrot.slane %v1410, 5
      %v1549 = vrot.slane %v1455, 6
      %v1551 = vrot.slane %v1500, 7
      %vm1553 = vcmask 7168
      %v1554 = vsel %vm1553, %v824, %v1525
      %vm1555 = vcmask 15360
      %v1556 = vsel %vm1555, %v1554, %v1527
      %vm1557 = vcmask 23552
      %v1558 = vsel %vm1557, %v1556, %v1529
      %vm1559 = vcmask 31744
      %v1560 = vsel %vm1559, %v1558, %v1531
      %vm1561 = vcmask 39936
      %v1562 = vsel %vm1561, %v1560, %v1533
      %vm1563 = vcmask 48128
      %v1564 = vsel %vm1563, %v1562, %v1535
      %vm1565 = vcmask 56320
      %v1566 = vsel %vm1565, %v1564, %v1537
      %vm1567 = vcmask 64512
      %v1568 = vsel %vm1567, %v1566, %v1185
      %vm1569 = vcmask 72704
      %v1570 = vsel %vm1569, %v1568, %v1539
      %vm1571 = vcmask 80896
      %v1572 = vsel %vm1571, %v1570, %v1541
      %vm1573 = vcmask 89088
      %v1574 = vsel %vm1573, %v1572, %v1543
      %v1575 = vsel %vm408, %v1574, %v1545
      %vm1576 = vcmask 105472
      %v1577 = vsel %vm1576, %v1575, %v1547
      %vm1578 = vcmask 113664
      %v1579 = vsel %vm1578, %v1577, %v1549
      %vm1580 = vcmask 121856
      %v1581 = vsel %vm1580, %v1579, %v1551
      %vm1582 = vcmask 122880
      %1583 = vst.msk [vmem:[#allocation4] sm:$0x1] %vm1582, %v1581
    $region17: #{tpu_custom_call.1} parent=1 // pred_fallthru
      _
    %v1584 = vld [vmem:[%s2] sm:$0x3]
    %v1585 = vld [vmem:[#allocation3] sm:$0xff]
    %v1586 = vld [vmem:[#allocation3 + $0x8] sm:$0xff]
    %v1587 = vld [vmem:[#allocation4] sm:$0x1]
    %v1588 = vlaneseq
    %v1589 = vshrl.u32 %v1588, 7
    %v1590 = vsub.s32 7, %v1589
    %v1591 = vrot.slane %v1586, %v1590
    %v1592 = vmul.f32 %v1591, 0.0
    %vm1593 = vcmask 130048
    %v1594 = vsel %vm1593, %v1592, 0.0
    %1595 = vadd.xlane.f32.xlu0 %v1594
    %v1596 = vpop.xlane.xlu0 %1595
    %v1597 = vsub.f32 %v1584, %v1596
    %v1599 = vlaneseq
    %v1600 = vshrl.u32 %v1599, 7
    %v1601 = vsub.s32 0, %v1600
    %v1602 = vrot.slane %v1587, %v1601
    %v1604 = vmul.f32 %v1597, %v1602
    %vm1605 = vcmp.eq.s32.totalorder %v16, 15
    %v1606 = vsel %vm1605, 1, 0
    %v1607 = vcvt.s32.f32 %v1606
    %1609 = vset.pattern.permute.xlu0 15
    %1610 = vperm.xlu0 %1609, %v1604
    %v1611 = vpop.permute.xlu0 %1610
    %v1613 = vmul.f32 %v1611, %v1607
    %v1614 = vadd.f32 %v1613, 0.0
    %v1615 = vlaneseq
    %v1616 = vshrl.u32 %v1615, 7
    %v1617 = vsub.s32 6, %v1616
    %v1618 = vrot.slane %v1586, %v1617
    %v1619 = vmul.f32 %v1614, %v1618
    %vm1620 = vcmask 123904
    %v1621 = vsel %vm1620, %v1619, 0.0
    %1622 = vadd.xlane.f32.xlu0 %v1621
    %v1623 = vpop.xlane.xlu0 %1622
    %v1624 = vsub.f32 %v1584, %v1623
    %v1625 = vmul.f32 %v1624, %v1602
    %vm1626 = vcmp.eq.s32.totalorder %v16, 14
    %v1627 = vsel %vm1626, 1, 0
    %v1628 = vcvt.s32.f32 %v1627
    %1630 = vset.pattern.permute.xlu0 14
    %1631 = vperm.xlu0 %1630, %v1625
    %v1632 = vpop.permute.xlu0 %1631
    %v1634 = vmul.f32 %v1632, %v1628
    %v1635 = vadd.f32 %v1614, %v1634
    %v1636 = vlaneseq
    %v1637 = vshrl.u32 %v1636, 7
    %v1638 = vsub.s32 5, %v1637
    %v1639 = vrot.slane %v1586, %v1638
    %v1640 = vmul.f32 %v1635, %v1639
    %v1641 = vsel %vm1620, %v1640, 0.0
    %1642 = vadd.xlane.f32.xlu0 %v1641
    %v1643 = vpop.xlane.xlu0 %1642
    %v1644 = vsub.f32 %v1584, %v1643
    %v1645 = vmul.f32 %v1644, %v1602
    %vm1646 = vcmp.eq.s32.totalorder %v16, 13
    %v1647 = vsel %vm1646, 1, 0
    %v1648 = vcvt.s32.f32 %v1647
    %1650 = vset.pattern.permute.xlu0 13
    %1651 = vperm.xlu0 %1650, %v1645
    %v1652 = vpop.permute.xlu0 %1651
    %v1654 = vmul.f32 %v1652, %v1648
    %v1655 = vadd.f32 %v1635, %v1654
    %v1656 = vlaneseq
    %v1657 = vshrl.u32 %v1656, 7
    %v1658 = vsub.s32 4, %v1657
    %v1659 = vrot.slane %v1586, %v1658
    %v1660 = vmul.f32 %v1655, %v1659
    %v1661 = vsel %vm1620, %v1660, 0.0
    %1662 = vadd.xlane.f32.xlu0 %v1661
    %v1663 = vpop.xlane.xlu0 %1662
    %v1664 = vsub.f32 %v1584, %v1663
    %v1665 = vmul.f32 %v1664, %v1602
    %vm1666 = vcmp.eq.s32.totalorder %v16, 12
    %v1667 = vsel %vm1666, 1, 0
    %v1668 = vcvt.s32.f32 %v1667
    %1670 = vset.pattern.permute.xlu0 12
    %1671 = vperm.xlu0 %1670, %v1665
    %v1672 = vpop.permute.xlu0 %1671
    %v1674 = vmul.f32 %v1672, %v1668
    %v1675 = vadd.f32 %v1655, %v1674
    %v1676 = vlaneseq
    %v1677 = vshrl.u32 %v1676, 7
    %v1678 = vsub.s32 3, %v1677
    %v1679 = vrot.slane %v1586, %v1678
    %v1680 = vmul.f32 %v1675, %v1679
    %v1681 = vsel %vm1620, %v1680, 0.0
    %1682 = vadd.xlane.f32.xlu0 %v1681
    %v1683 = vpop.xlane.xlu0 %1682
    %v1684 = vsub.f32 %v1584, %v1683
    %v1685 = vmul.f32 %v1684, %v1602
    %vm1686 = vcmp.eq.s32.totalorder %v16, 11
    %v1687 = vsel %vm1686, 1, 0
    %v1688 = vcvt.s32.f32 %v1687
    %1690 = vset.pattern.permute.xlu0 11
    %1691 = vperm.xlu0 %1690, %v1685
    %v1692 = vpop.permute.xlu0 %1691
    %v1694 = vmul.f32 %v1692, %v1688
    %v1695 = vadd.f32 %v1675, %v1694
    %v1696 = vlaneseq
    %v1697 = vshrl.u32 %v1696, 7
    %v1698 = vsub.s32 2, %v1697
    %v1699 = vrot.slane %v1586, %v1698
    %v1700 = vmul.f32 %v1695, %v1699
    %v1701 = vsel %vm1620, %v1700, 0.0
    %1702 = vadd.xlane.f32.xlu0 %v1701
    %v1703 = vpop.xlane.xlu0 %1702
    %v1704 = vsub.f32 %v1584, %v1703
    %v1705 = vmul.f32 %v1704, %v1602
    %vm1706 = vcmp.eq.s32.totalorder %v16, 10
    %v1707 = vsel %vm1706, 1, 0
    %v1708 = vcvt.s32.f32 %v1707
    %1710 = vset.pattern.permute.xlu0 10
    %1711 = vperm.xlu0 %1710, %v1705
    %v1712 = vpop.permute.xlu0 %1711
    %v1714 = vmul.f32 %v1712, %v1708
    %v1715 = vadd.f32 %v1695, %v1714
    %v1716 = vlaneseq
    %v1717 = vshrl.u32 %v1716, 7
    %v1718 = vsub.s32 1, %v1717
    %v1719 = vrot.slane %v1586, %v1718
    %v1720 = vmul.f32 %v1715, %v1719
    %v1721 = vsel %vm1620, %v1720, 0.0
    %1722 = vadd.xlane.f32.xlu0 %v1721
    %v1723 = vpop.xlane.xlu0 %1722
    %v1724 = vsub.f32 %v1584, %v1723
    %v1725 = vmul.f32 %v1724, %v1602
    %vm1726 = vcmp.eq.s32.totalorder %v16, 9
    %v1727 = vsel %vm1726, 1, 0
    %v1728 = vcvt.s32.f32 %v1727
    %1730 = vset.pattern.permute.xlu0 9
    %1731 = vperm.xlu0 %1730, %v1725
    %v1732 = vpop.permute.xlu0 %1731
    %v1734 = vmul.f32 %v1732, %v1728
    %v1735 = vadd.f32 %v1715, %v1734
    %v1736 = vlaneseq
    %v1737 = vshrl.u32 %v1736, 7
    %v1738 = vsub.s32 0, %v1737
    %v1739 = vrot.slane %v1586, %v1738
    %v1740 = vmul.f32 %v1735, %v1739
    %v1741 = vsel %vm1620, %v1740, 0.0
    %1742 = vadd.xlane.f32.xlu0 %v1741
    %v1743 = vpop.xlane.xlu0 %1742
    %v1744 = vsub.f32 %v1584, %v1743
    %v1745 = vmul.f32 %v1744, %v1602
    %vm1746 = vcmp.eq.s32.totalorder %v16, 8
    %v1747 = vsel %vm1746, 1, 0
    %v1748 = vcvt.s32.f32 %v1747
    %1750 = vset.pattern.permute.xlu0 8
    %1751 = vperm.xlu0 %1750, %v1745
    %v1752 = vpop.permute.xlu0 %1751
    %v1754 = vmul.f32 %v1752, %v1748
    %v1755 = vadd.f32 %v1735, %v1754
    %v1756 = vlaneseq
    %v1757 = vshrl.u32 %v1756, 7
    %v1758 = vsub.s32 7, %v1757
    %v1759 = vrot.slane %v1585, %v1758
    %v1760 = vmul.f32 %v1755, %v1759
    %v1761 = vsel %vm1620, %v1760, 0.0
    %1762 = vadd.xlane.f32.xlu0 %v1761
    %v1763 = vpop.xlane.xlu0 %1762
    %v1764 = vsub.f32 %v1584, %v1763
    %v1765 = vmul.f32 %v1764, %v1602
    %vm1766 = vcmp.eq.s32.totalorder %v16, 7
    %v1767 = vsel %vm1766, 1, 0
    %v1768 = vcvt.s32.f32 %v1767
    %1770 = vset.pattern.permute.xlu0 7
    %1771 = vperm.xlu0 %1770, %v1765
    %v1772 = vpop.permute.xlu0 %1771
    %v1774 = vmul.f32 %v1772, %v1768
    %v1775 = vadd.f32 %v1755, %v1774
    %v1776 = vlaneseq
    %v1777 = vshrl.u32 %v1776, 7
    %v1778 = vsub.s32 6, %v1777
    %v1779 = vrot.slane %v1585, %v1778
    %v1780 = vmul.f32 %v1775, %v1779
    %v1781 = vsel %vm1620, %v1780, 0.0
    %1782 = vadd.xlane.f32.xlu0 %v1781
    %v1783 = vpop.xlane.xlu0 %1782
    %v1784 = vsub.f32 %v1584, %v1783
    %v1785 = vmul.f32 %v1784, %v1602
    %vm1786 = vcmp.eq.s32.totalorder %v16, 6
    %v1787 = vsel %vm1786, 1, 0
    %v1788 = vcvt.s32.f32 %v1787
    %1790 = vset.pattern.permute.xlu0 6
    %1791 = vperm.xlu0 %1790, %v1785
    %v1792 = vpop.permute.xlu0 %1791
    %v1794 = vmul.f32 %v1792, %v1788
    %v1795 = vadd.f32 %v1775, %v1794
    %v1796 = vlaneseq
    %v1797 = vshrl.u32 %v1796, 7
    %v1798 = vsub.s32 5, %v1797
    %v1799 = vrot.slane %v1585, %v1798
    %v1800 = vmul.f32 %v1795, %v1799
    %v1801 = vsel %vm1620, %v1800, 0.0
    %1802 = vadd.xlane.f32.xlu0 %v1801
    %v1803 = vpop.xlane.xlu0 %1802
    %v1804 = vsub.f32 %v1584, %v1803
    %v1805 = vmul.f32 %v1804, %v1602
    %vm1806 = vcmp.eq.s32.totalorder %v16, 5
    %v1807 = vsel %vm1806, 1, 0
    %v1808 = vcvt.s32.f32 %v1807
    %1810 = vset.pattern.permute.xlu0 5
    %1811 = vperm.xlu0 %1810, %v1805
    %v1812 = vpop.permute.xlu0 %1811
    %v1814 = vmul.f32 %v1812, %v1808
    %v1815 = vadd.f32 %v1795, %v1814
    %v1816 = vlaneseq
    %v1817 = vshrl.u32 %v1816, 7
    %v1818 = vsub.s32 4, %v1817
    %v1819 = vrot.slane %v1585, %v1818
    %v1820 = vmul.f32 %v1815, %v1819
    %v1821 = vsel %vm1620, %v1820, 0.0
    %1822 = vadd.xlane.f32.xlu0 %v1821
    %v1823 = vpop.xlane.xlu0 %1822
    %v1824 = vsub.f32 %v1584, %v1823
    %v1825 = vmul.f32 %v1824, %v1602
    %vm1826 = vcmp.eq.s32.totalorder %v16, 4
    %v1827 = vsel %vm1826, 1, 0
    %v1828 = vcvt.s32.f32 %v1827
    %1830 = vset.pattern.permute.xlu0 4
    %1831 = vperm.xlu0 %1830, %v1825
    %v1832 = vpop.permute.xlu0 %1831
    %v1834 = vmul.f32 %v1832, %v1828
    %v1835 = vadd.f32 %v1815, %v1834
    %v1836 = vlaneseq
    %v1837 = vshrl.u32 %v1836, 7
    %v1838 = vsub.s32 3, %v1837
    %v1839 = vrot.slane %v1585, %v1838
    %v1840 = vmul.f32 %v1835, %v1839
    %v1841 = vsel %vm1620, %v1840, 0.0
    %1842 = vadd.xlane.f32.xlu0 %v1841
    %v1843 = vpop.xlane.xlu0 %1842
    %v1844 = vsub.f32 %v1584, %v1843
    %v1845 = vmul.f32 %v1844, %v1602
    %vm1846 = vcmp.eq.s32.totalorder %v16, 3
    %v1847 = vsel %vm1846, 1, 0
    %v1848 = vcvt.s32.f32 %v1847
    %1850 = vset.pattern.permute.xlu0 3
    %1851 = vperm.xlu0 %1850, %v1845
    %v1852 = vpop.permute.xlu0 %1851
    %v1854 = vmul.f32 %v1852, %v1848
    %v1855 = vadd.f32 %v1835, %v1854
    %v1856 = vlaneseq
    %v1857 = vshrl.u32 %v1856, 7
    %v1858 = vsub.s32 2, %v1857
    %v1859 = vrot.slane %v1585, %v1858
    %v1860 = vmul.f32 %v1855, %v1859
    %v1861 = vsel %vm1620, %v1860, 0.0
    %1862 = vadd.xlane.f32.xlu0 %v1861
    %v1863 = vpop.xlane.xlu0 %1862
    %v1864 = vsub.f32 %v1584, %v1863
    %v1865 = vmul.f32 %v1864, %v1602
    %vm1866 = vcmp.eq.s32.totalorder %v16, 2
    %v1867 = vsel %vm1866, 1, 0
    %v1868 = vcvt.s32.f32 %v1867
    %1870 = vset.pattern.permute.xlu0 2
    %1871 = vperm.xlu0 %1870, %v1865
    %v1872 = vpop.permute.xlu0 %1871
    %v1874 = vmul.f32 %v1872, %v1868
    %v1875 = vadd.f32 %v1855, %v1874
    %v1876 = vlaneseq
    %v1877 = vshrl.u32 %v1876, 7
    %v1878 = vsub.s32 1, %v1877
    %v1879 = vrot.slane %v1585, %v1878
    %v1880 = vmul.f32 %v1875, %v1879
    %v1881 = vsel %vm1620, %v1880, 0.0
    %1882 = vadd.xlane.f32.xlu0 %v1881
    %v1883 = vpop.xlane.xlu0 %1882
    %v1884 = vsub.f32 %v1584, %v1883
    %v1885 = vmul.f32 %v1884, %v1602
    %vm1886 = vcmp.eq.s32.totalorder %v16, 1
    %v1887 = vsel %vm1886, 1, 0
    %v1888 = vcvt.s32.f32 %v1887
    %1890 = vset.pattern.permute.xlu0 1
    %1891 = vperm.xlu0 %1890, %v1885
    %v1892 = vpop.permute.xlu0 %1891
    %v1894 = vmul.f32 %v1892, %v1888
    %v1895 = vadd.f32 %v1875, %v1894
    %v1896 = vlaneseq
    %v1897 = vshrl.u32 %v1896, 7
    %v1898 = vsub.s32 0, %v1897
    %v1899 = vrot.slane %v1585, %v1898
    %v1900 = vmul.f32 %v1895, %v1899
    %v1901 = vsel %vm1620, %v1900, 0.0
    %1902 = vadd.xlane.f32.xlu0 %v1901
    %v1903 = vpop.xlane.xlu0 %1902
    %v1904 = vsub.f32 %v1584, %v1903
    %v1905 = vmul.f32 %v1904, %v1602
    %vm1906 = vcmp.eq.s32.totalorder %v16, 0
    %v1907 = vsel %vm1906, 1, 0
    %v1908 = vcvt.s32.f32 %v1907
    %1910 = vset.pattern.permute.xlu0 0
    %1911 = vperm.xlu0 %1910, %v1905
    %v1912 = vpop.permute.xlu0 %1911
    %v1914 = vmul.f32 %v1912, %v1908
    %v1915 = vadd.f32 %v1895, %v1914
    %v1916 = vld [vmem:[#allocation2] sm:$0xff]
    %v1917 = vld [vmem:[#allocation2 + $0x8] sm:$0xff]
    %v1918 = vld [vmem:[#allocation2 + $0x10] sm:$0xff]
    %v1919 = vld [vmem:[#allocation2 + $0x18] sm:$0xff]
    %v1920 = vld [vmem:[#allocation2 + $0x20] sm:$0xff]
    %v1921 = vld [vmem:[#allocation2 + $0x28] sm:$0xff]
    %v1922 = vld [vmem:[#allocation2 + $0x30] sm:$0xff]
    %v1923 = vld [vmem:[#allocation2 + $0x38] sm:$0xff]
    %v1925 = vsel %vm1593, %v1915, 0
    %1927 = vmatprep.subr.mxu0 %v1917
    %1928 = vmatpush1.msra.mxu0 %v1916
    %1929 = vmatprep.subr.mxu0 %v1921
    %1930 = vmatpush1.msra.mxu0 %v1920
    %1931 = vmatprep.subr.mxu0 0.0
    %1932 = vmatpush1.msra.mxu0 0.0
    %1933 = vmatprep.subr.mxu0 0.0
    %1934 = vmatpush1.msra.mxu0 0.0
    %1935 = vmatprep.subr.mxu0 0.0
    %1936 = vmatpush1.msra.mxu0 0.0
    %1937 = vmatprep.subr.mxu0 0.0
    %1938 = vmatpush1.msra.mxu0 0.0
    %1939 = vmatprep.subr.mxu0 0.0
    %1940 = vmatpush1.msra.mxu0 0.0
    %1941 = vmatprep.subr.mxu0 0.0
    %1942 = vmatpush1.msra.mxu0 0.0
    %1943 = vmatprep.subr.mxu0 0.0
    %1944 = vmatpush1.msra.mxu0 0.0
    %1945 = vmatprep.subr.mxu0 0.0
    %1946 = vmatpush1.msra.mxu0 0.0
    %1947 = vmatprep.subr.mxu0 0.0
    %1948 = vmatpush1.msra.mxu0 0.0
    %1949 = vmatprep.subr.mxu0 0.0
    %1950 = vmatpush1.msra.mxu0 0.0
    %1951 = vmatprep.subr.mxu0 0.0
    %1952 = vmatpush1.msra.mxu0 0.0
    %1953 = vmatprep.subr.mxu0 0.0
    %1954 = vmatpush1.msra.mxu0 0.0
    %1955 = vmatprep.subr.mxu0 0.0
    %1956 = vmatpush1.msra.mxu0 0.0
    %1957 = vmatprep.subr.mxu0 0.0
    %1958 = vmatpush1.msra.mxu0 0.0
    %1959 = vmatprep.subr.mxu0 0.0
    %1960 = vmatpush1.msra.mxu0 0.0
    %1961 = vmatprep.subr.mxu0 0.0
    %1962 = vmatpush1.msra.mxu0 0.0
    %1963 = vmatprep.subr.mxu0 0.0
    %1964 = vmatpush1.msra.mxu0 0.0
    %1965 = vmatprep.subr.mxu0 0.0
    %1966 = vmatpush1.msra.mxu0 0.0
    %1967 = vmatprep.subr.mxu0 0.0
    %1968 = vmatpush1.msra.mxu0 0.0
    %1969 = vmatprep.subr.mxu0 0.0
    %1970 = vmatpush1.msra.mxu0 0.0
    %1971 = vmatprep.subr.mxu0 0.0
    %1972 = vmatpush1.msra.mxu0 0.0
    %1973 = vmatprep.subr.mxu0 0.0
    %1974 = vmatpush1.msra.mxu0 0.0
    %1975 = vmatprep.subr.mxu0 0.0
    %1976 = vmatpush1.msra.mxu0 0.0
    %1977 = vmatprep.subr.mxu0 0.0
    %1978 = vmatpush1.msra.mxu0 0.0
    %1979 = vmatprep.subr.mxu0 0.0
    %1980 = vmatpush1.msra.mxu0 0.0
    %1981 = vmatprep.subr.mxu0 0.0
    %1982 = vmatpush1.msra.mxu0 0.0
    %1983 = vmatprep.subr.mxu0 0.0
    %1984 = vmatpush1.msra.mxu0 0.0
    %1985 = vmatprep.subr.mxu0 0.0
    %1986 = vmatpush1.msra.mxu0 0.0
    %1987 = vmatprep.subr.mxu0 0.0
    %1988 = vmatpush1.msra.mxu0 0.0
    %1989 = vmatprep.subr.mxu0 0.0
    %1990 = vmatpush1.msra.mxu0 0.0
    %1991 = vmatprep.mubr.f32.mxu0 0.0
    %1992 = vmatmul.mubr.f32.gmra.mrb[0].mxu0 %v1925
    %v1993 = vpop.f32.mrb[0].mxu0
    %v1994 = vadd.f32 0.0, %v1993
    %v1995 = vpop.f32.mrb[0].mxu0
    %v1996 = vadd.f32 0.0, %v1995
    %1997 = vdwg.mxu0
    %1998 = vmatprep.subr.mxu0 %v1919
    %1999 = vmatpush1.msra.mxu0 %v1918
    %2000 = vmatprep.subr.mxu0 %v1923
    %2001 = vmatpush1.msra.mxu0 %v1922
    %2002 = vmatprep.subr.mxu0 0.0
    %2003 = vmatpush1.msra.mxu0 0.0
    %2004 = vmatprep.subr.mxu0 0.0
    %2005 = vmatpush1.msra.mxu0 0.0
    %2006 = vmatprep.subr.mxu0 0.0
    %2007 = vmatpush1.msra.mxu0 0.0
    %2008 = vmatprep.subr.mxu0 0.0
    %2009 = vmatpush1.msra.mxu0 0.0
    %2010 = vmatprep.subr.mxu0 0.0
    %2011 = vmatpush1.msra.mxu0 0.0
    %2012 = vmatprep.subr.mxu0 0.0
    %2013 = vmatpush1.msra.mxu0 0.0
    %2014 = vmatprep.subr.mxu0 0.0
    %2015 = vmatpush1.msra.mxu0 0.0
    %2016 = vmatprep.subr.mxu0 0.0
    %2017 = vmatpush1.msra.mxu0 0.0
    %2018 = vmatprep.subr.mxu0 0.0
    %2019 = vmatpush1.msra.mxu0 0.0
    %2020 = vmatprep.subr.mxu0 0.0
    %2021 = vmatpush1.msra.mxu0 0.0
    %2022 = vmatprep.subr.mxu0 0.0
    %2023 = vmatpush1.msra.mxu0 0.0
    %2024 = vmatprep.subr.mxu0 0.0
    %2025 = vmatpush1.msra.mxu0 0.0
    %2026 = vmatprep.subr.mxu0 0.0
    %2027 = vmatpush1.msra.mxu0 0.0
    %2028 = vmatprep.subr.mxu0 0.0
    %2029 = vmatpush1.msra.mxu0 0.0
    %2030 = vmatprep.subr.mxu0 0.0
    %2031 = vmatpush1.msra.mxu0 0.0
    %2032 = vmatprep.subr.mxu0 0.0
    %2033 = vmatpush1.msra.mxu0 0.0
    %2034 = vmatprep.subr.mxu0 0.0
    %2035 = vmatpush1.msra.mxu0 0.0
    %2036 = vmatprep.subr.mxu0 0.0
    %2037 = vmatpush1.msra.mxu0 0.0
    %2038 = vmatprep.subr.mxu0 0.0
    %2039 = vmatpush1.msra.mxu0 0.0
    %2040 = vmatprep.subr.mxu0 0.0
    %2041 = vmatpush1.msra.mxu0 0.0
    %2042 = vmatprep.subr.mxu0 0.0
    %2043 = vmatpush1.msra.mxu0 0.0
    %2044 = vmatprep.subr.mxu0 0.0
    %2045 = vmatpush1.msra.mxu0 0.0
    %2046 = vmatprep.subr.mxu0 0.0
    %2047 = vmatpush1.msra.mxu0 0.0
    %2048 = vmatprep.subr.mxu0 0.0
    %2049 = vmatpush1.msra.mxu0 0.0
    %2050 = vmatprep.subr.mxu0 0.0
    %2051 = vmatpush1.msra.mxu0 0.0
    %2052 = vmatprep.subr.mxu0 0.0
    %2053 = vmatpush1.msra.mxu0 0.0
    %2054 = vmatprep.subr.mxu0 0.0
    %2055 = vmatpush1.msra.mxu0 0.0
    %2056 = vmatprep.subr.mxu0 0.0
    %2057 = vmatpush1.msra.mxu0 0.0
    %2058 = vmatprep.subr.mxu0 0.0
    %2059 = vmatpush1.msra.mxu0 0.0
    %2060 = vmatprep.subr.mxu0 0.0
    %2061 = vmatpush1.msra.mxu0 0.0
    %2062 = vmatprep.mubr.f32.mxu0 0.0
    %2063 = vmatmul.mubr.f32.gmra.mrb[0].mxu0 %v1925
    %v2064 = vpop.f32.mrb[0].mxu0
    %v2065 = vadd.f32 0.0, %v2064
    %v2066 = vpop.f32.mrb[0].mxu0
    %v2067 = vadd.f32 0.0, %v2066
    %2068 = vdwg.mxu0
    %v2073 = vcombine.low %v1994, %v1996
    %v2074 = vcombine.low %v2065, %v2067
    %v2076 = vunpack.c.l.s4 1983009808
    %v2077 = vunpack.c.0.s8 %v2076
    %v2078 = vlaneseq
    %v2079 = vshrl.u32 %v2078, 7
    %v2080 = vsub.s32 %v2077, %v2079
    %v2081 = vrot.slane %v2073, %v2080
    %v2083 = vunpack.c.l.s4 1983009808
    %v2084 = vunpack.c.0.s8 %v2083
    %v2085 = vlaneseq
    %v2086 = vshrl.u32 %v2085, 7
    %v2087 = vsub.s32 %v2084, %v2086
    %v2088 = vrot.slane %v2074, %v2087
    %v2089 = vcombine.low %v2081, %v2088
    %2091 = vst [vmem:[#allocation5] sm:$0xff] %v2089
    // Predicated region
    $region18: #{tpu_custom_call.1} parent=1 // pred_check
      _
    $region19: #{tpu_custom_call.1} parent=1 // pred_check_branch
      %2093 = sbr.rel (0) target = $region21
    $region20: #{tpu_custom_call.1} parent=1 // pred_region
      %s2095 = ssub.s32 128, 128
      %2096 = vsyncadd [#allocation6], %s2095
      %s2098 = sshll.u32 [#allocation5], 4
      %s2099 = int_to_ptr.vmem [resolvable:$true] %s2098
      %2101 = dma.vmem_to_hbm [thread:$0]  %s2099, 128, %s3, [#allocation6]
    $region21: #{tpu_custom_call.1} parent=1 // pred_fallthru
      _
    // Predicated region
    $region22: #{tpu_custom_call.1} parent=1 // pred_check
      _
    $region23: #{tpu_custom_call.1} parent=1 // pred_check_branch
      %2103 = sbr.rel (0) target = $region25
    $region24: #{tpu_custom_call.1} parent=1 // pred_region
      %2104 = dma.done [#allocation6], 128
    $region25: #{tpu_custom_call.1} parent=1 // pred_fallthru
      _
    %2105 = vsyncpa [#allocation6], 1

</llo_original>
